<compile_context>
chip_gen: v7x
topology: tpu7x:2x2x1
jax: 0.10.0
libtpu: 0.0.40
codegen_flags: <defaults>
</compile_context>

<pallas_src>
import functools

import jax
import jax.numpy as jnp
from jax.experimental import pallas as pl
from jax.experimental.pallas import tpu as pltpu


def _round_up(x, m):
    return (x + m - 1) // m * m


def _sigmoid(x):
    # tanh-form sigmoid: one EUP push per element instead of two (exp + recip).
    return 0.5 * jnp.tanh(0.5 * x) + 0.5


def _pad_gate_cols(w, H, Hp):
    """(in, 4H) -> (in, 4Hp): zero-pad each PyTorch gate slot (i|f|g|o) to Hp cols."""
    if Hp == H:
        return w
    pad = jnp.zeros((w.shape[0], Hp - H), w.dtype)
    return jnp.concatenate(
        [jnp.concatenate([w[:, g * H:(g + 1) * H], pad], axis=1) for g in range(4)],
        axis=1)


# --------------------------------------------------------------------------
# Shared recurrence body: one grid step = one (batch block, time block).
# --------------------------------------------------------------------------
def _lstm_block_steps(x_ref, wih_ref, whh_ref, b_ref, hN_ref, cN_ref,
                      gx_scr, hs_scr, *, tb, Hp, seq_len, masked):
    t = pl.program_id(1)

    @pl.when(t == 0)
    def _():
        # h_n/c_n output blocks double as the recurrence carries (resident over t).
        hN_ref[...] = jnp.zeros_like(hN_ref)
        cN_ref[...] = jnp.zeros_like(cN_ref)

    Bb = x_ref.shape[0]
    E = x_ref.shape[2]
    G = 4 * Hp

    # Hoisted input transform + bias: one MXU matmul for the whole time block,
    # off the sequential per-step critical path.
    x_blk = x_ref[...].reshape(Bb * tb, E)                         # bf16
    gx_scr[...] = (jnp.dot(x_blk, wih_ref[...],
                           preferred_element_type=jnp.float32)
                   + b_ref[...]).reshape(Bb, tb, G)

    whh = whh_ref[...]                                             # (Hp, 4Hp) bf16 resident

    def step(k, carry):
        h, c = carry                                               # (Bb, Hp) f32
        gx = gx_scr[:, pl.ds(k, 1), :].reshape(Bb, G)
        gates = gx + jnp.dot(h.astype(jnp.bfloat16), whh,
                             preferred_element_type=jnp.float32)   # (Bb, 4Hp) f32
        # PyTorch gate order i, f, g, o; slices are 128-aligned since Hp % 128 == 0.
        # Elementwise kept in f32 (safe on v5e; TODO(synk): bf16 on v6e/v7x).
        i_g = _sigmoid(gates[:, 0 * Hp:1 * Hp])
        f_g = _sigmoid(gates[:, 1 * Hp:2 * Hp])
        g_g = jnp.tanh(gates[:, 2 * Hp:3 * Hp])
        o_g = _sigmoid(gates[:, 3 * Hp:4 * Hp])
        c_new = f_g * c + i_g * g_g
        h_new = o_g * jnp.tanh(c_new)
        if masked:  # only emitted when S was padded up to a multiple of tb
            valid = (t * tb + k) < seq_len
            c_new = jnp.where(valid, c_new, c)
            h_new = jnp.where(valid, h_new, h)
        hs_scr[:, pl.ds(k, 1), :] = h_new[:, None, :]
        return h_new, c_new

    h, c = jax.lax.fori_loop(0, tb, step, (hN_ref[0], cN_ref[0]), unroll=True)
    hN_ref[0] = h
    cN_ref[0] = c


def lstm_lm_fused_kernel(x_ref, wih_ref, whh_ref, b_ref, wproj_ref, bproj_ref,
                         out_ref, hN_ref, cN_ref, gx_scr, hs_scr,
                         *, tb, Hp, Vp, seq_len, masked):
    _lstm_block_steps(x_ref, wih_ref, whh_ref, b_ref, hN_ref, cN_ref,
                      gx_scr, hs_scr, tb=tb, Hp=Hp, seq_len=seq_len, masked=masked)
    # Fused vocab projection epilogue: no hs HBM round trip, lane-dense Vp output.
    Bb = x_ref.shape[0]
    hs_bf = hs_scr[...].astype(jnp.bfloat16).reshape(Bb * tb, Hp)
    out_ref[...] = (jnp.dot(hs_bf, wproj_ref[...],
                            preferred_element_type=jnp.float32)
                    + bproj_ref[...]).reshape(Bb, tb, Vp)


def lstm_recurrence_kernel(x_ref, wih_ref, whh_ref, b_ref,
                           hs_ref, hN_ref, cN_ref, gx_scr, hs_scr,
                           *, tb, Hp, seq_len, masked):
    _lstm_block_steps(x_ref, wih_ref, whh_ref, b_ref, hN_ref, cN_ref,
                      gx_scr, hs_scr, tb=tb, Hp=Hp, seq_len=seq_len, masked=masked)
    # hs emitted in bf16: halves HBM write here and the projection's read.
    hs_ref[...] = hs_scr[...].astype(jnp.bfloat16)


# --------------------------------------------------------------------------
# Large-V fallback: (B*Sp, Hp) @ (Hp, Vp) parallel tiled matmul (bf16 hs input).
# --------------------------------------------------------------------------
def vocab_projection_kernel(hs_ref, w_ref, b_ref, out_ref):
    out_ref[...] = (jnp.dot(hs_ref[...], w_ref[...],
                            preferred_element_type=jnp.float32) + b_ref[...])


def vocab_projection(hs, wproj, bproj):
    """hs: (B, Sp, Hp) bf16. wproj: (Hp, Vp) bf16. bproj: (1, Vp) f32 -> (B, Sp, Vp) f32."""
    B, Sp, Hp = hs.shape
    Vp = wproj.shape[1]
    M = B * Sp
    hs_flat = hs.reshape(M, Hp)

    Mp = _round_up(M, 8)
    tm = min(512, Mp)
    Mp = _round_up(Mp, tm)
    if Mp != M:
        hs_flat = jnp.pad(hs_flat, ((0, Mp - M), (0, 0)))
    tn = 512 if Vp % 512 == 0 else (256 if Vp % 256 == 0 else 128)

    out = pl.pallas_call(
        vocab_projection_kernel,
        out_shape=jax.ShapeDtypeStruct((Mp, Vp), jnp.float32),
        grid_spec=pltpu.PrefetchScalarGridSpec(
            num_scalar_prefetch=0,
            grid=(Mp // tm, Vp // tn),
            in_specs=[
                pl.BlockSpec((tm, Hp), lambda i, j: (i, 0)),   # bf16 hs rows
                pl.BlockSpec((Hp, tn), lambda i, j: (0, j)),   # V-tiled weight (bf16)
                pl.BlockSpec((1, tn), lambda i, j: (0, j)),    # V-tiled bias
            ],
            out_specs=pl.BlockSpec((tm, tn), lambda i, j: (i, j)),
        ),
        compiler_params=pltpu.CompilerParams(
            dimension_semantics=("parallel", "parallel")),
    )(hs_flat, wproj, bproj)
    return out[:M].reshape(B, Sp, Vp)


# --------------------------------------------------------------------------
# Forward wrapper
# --------------------------------------------------------------------------
def lstm_lm_forward(tokens, params, *, time_block=16, fuse_projection=None):
    """tokens: (B, S) int32 -> (logits (B,S,V), (h_n (1,B,H), c_n (1,B,H)))."""
    B, S = tokens.shape
    E = params["wih"].shape[0]
    H = params["whh"].shape[0]
    V = params["wproj"].shape[1]

    # Lane-dense padding: gate slices and logits stores land on vreg boundaries.
    Hp = _round_up(H, 128)
    Vp = _round_up(V, 128)

    # Time blocking (amortizes ~0.35us grid overhead); pad S instead of gcd-collapse.
    if S <= time_block:
        tb, Sp = S, S
    else:
        tb = max(8, (time_block // 8) * 8)
        Sp = _round_up(S, tb)
    masked = (Sp != S)

    # Megacore batch split only when each half still fills the MXU rows (v7x);
    # on single-TensorCore chips this stays Bb == B.
    # TODO(synk): gate on actual chip generation via pltpu.get_tpu_info.
    Bb = B // 2 if (B % 2 == 0 and (B // 2) >= 256 and (B // 2) % 8 == 0) else B

    if fuse_projection is None:
        # Fuse when the resident (Hp, Vp) bf16 projection weight comfortably fits VMEM.
        fuse_projection = (Hp * Vp * 2) <= (4 << 20)

    # Pack weights for the kernels: bf16 MXU operands, f32 bias, per-gate Hp padding.
    wih_p = _pad_gate_cols(params["wih"], H, Hp).astype(jnp.bfloat16)          # (E, 4Hp)
    whh_p = _pad_gate_cols(jnp.pad(params["whh"], ((0, Hp - H), (0, 0))),
                           H, Hp).astype(jnp.bfloat16)                         # (Hp, 4Hp)
    b_p = _pad_gate_cols(params["b"], H, Hp).astype(jnp.float32)               # (1, 4Hp)
    wproj_p = jnp.pad(params["wproj"],
                      ((0, Hp - H), (0, Vp - V))).astype(jnp.bfloat16)         # (Hp, Vp)
    bproj_p = jnp.pad(params["bproj"], ((0, 0), (0, Vp - V)))                  # (1, Vp)

    # Embedding lookup (plain gather; the module's init_weights overwrites the
    # padding_idx row, so it behaves like a normal row). Padded steps are masked.
    if masked:
        tokens = jnp.pad(tokens, ((0, 0), (0, Sp - S)))
    x = params["embedding"][tokens].astype(jnp.bfloat16)                       # (B, Sp, E)

    grid = (B // Bb, Sp // tb)
    x_spec = pl.BlockSpec((Bb, tb, E), lambda b, t: (b, t, 0))
    weight_specs = [
        pl.BlockSpec((E, 4 * Hp), lambda b, t: (0, 0)),     # fused W_ih (resident)
        pl.BlockSpec((Hp, 4 * Hp), lambda b, t: (0, 0)),    # fused W_hh (resident)
        pl.BlockSpec((1, 4 * Hp), lambda b, t: (0, 0)),     # fused bias (resident)
    ]
    carry_specs = [
        pl.BlockSpec((1, Bb, Hp), lambda b, t: (0, b, 0)),  # h_n (carry, resident over t)
        pl.BlockSpec((1, Bb, Hp), lambda b, t: (0, b, 0)),  # c_n (carry, resident over t)
    ]
    carry_shapes = (jax.ShapeDtypeStruct((1, B, Hp), jnp.float32),
                    jax.ShapeDtypeStruct((1, B, Hp), jnp.float32))
    scratches = [
        pltpu.VMEM((Bb, tb, 4 * Hp), jnp.float32),          # block pre-gates
        pltpu.VMEM((Bb, tb, Hp), jnp.float32),              # block hidden states
    ]
    # TODO(synk): for production sizes on v7x (64 MiB VMEM), single-buffer the
    # resident weight specs and set CompilerParams(vmem_limit_bytes=...).
    cparams = pltpu.CompilerParams(
        dimension_semantics=("parallel", "arbitrary"))      # batch parallel, time sequential

    if fuse_projection:
        kernel = functools.partial(lstm_lm_fused_kernel, tb=tb, Hp=Hp, Vp=Vp,
                                   seq_len=S, masked=masked)
        logits_p, h_n, c_n = pl.pallas_call(
            kernel,
            out_shape=(jax.ShapeDtypeStruct((B, Sp, Vp), jnp.float32),) + carry_shapes,
            grid_spec=pltpu.PrefetchScalarGridSpec(
                num_scalar_prefetch=0,
                grid=grid,
                in_specs=[x_spec] + weight_specs + [
                    pl.BlockSpec((Hp, Vp), lambda b, t: (0, 0)),   # W_proj (resident)
                    pl.BlockSpec((1, Vp), lambda b, t: (0, 0)),    # b_proj (resident)
                ],
                out_specs=[pl.BlockSpec((Bb, tb, Vp), lambda b, t: (b, t, 0))]
                          + carry_specs,
                scratch_shapes=scratches,
            ),
            compiler_params=cparams,
        )(x, wih_p, whh_p, b_p, wproj_p, bproj_p)
    else:
        kernel = functools.partial(lstm_recurrence_kernel, tb=tb, Hp=Hp,
                                   seq_len=S, masked=masked)
        hs, h_n, c_n = pl.pallas_call(
            kernel,
            out_shape=(jax.ShapeDtypeStruct((B, Sp, Hp), jnp.bfloat16),) + carry_shapes,
            grid_spec=pltpu.PrefetchScalarGridSpec(
                num_scalar_prefetch=0,
                grid=grid,
                in_specs=[x_spec] + weight_specs,
                out_specs=[pl.BlockSpec((Bb, tb, Hp), lambda b, t: (b, t, 0))]
                          + carry_specs,
                scratch_shapes=scratches,
            ),
            compiler_params=cparams,
        )(x, wih_p, whh_p, b_p)
        logits_p = vocab_projection(hs, wproj_p, bproj_p)

    logits = logits_p[:, :S, :V]
    return logits, (h_n[:, :, :H], c_n[:, :, :H])


# --------------------------------------------------------------------------
# Parameter init mirroring the PyTorch module's shapes/init (natural layout)
# --------------------------------------------------------------------------
def init_params(key, vocab_size, embedding_size, hidden_size):
    k_emb, k_ih, k_hh, k_bih, k_bhh, k_proj = jax.random.split(key, 6)
    H, E, V = hidden_size, embedding_size, vocab_size
    initrange = 0.1
    bound = 1.0 / float(H ** 0.5)   # PyTorch default LSTM init range

    embedding = jax.random.uniform(k_emb, (V, E), jnp.float32, -initrange, initrange)
    w_ih = jax.random.uniform(k_ih, (4 * H, E), jnp.float32, -bound, bound)
    w_hh = jax.random.uniform(k_hh, (4 * H, H), jnp.float32, -bound, bound)
    b_ih = jax.random.uniform(k_bih, (4 * H,), jnp.float32, -bound, bound)
    b_hh = jax.random.uniform(k_bhh, (4 * H,), jnp.float32, -bound, bound)
    # nn.Linear(hidden, vocab): weight uniform(-0.1, 0.1), bias zero
    w_proj = jax.random.uniform(k_proj, (V, H), jnp.float32, -initrange, initrange)

    return {
        "embedding": embedding,                 # (V, E)
        "wih": w_ih.T,                          # (E, 4H), gate order i,f,g,o
        "whh": w_hh.T,                          # (H, 4H)
        "b": (b_ih + b_hh).reshape(1, 4 * H),   # (1, 4H)
        "wproj": w_proj.T,                      # (H, V)
        "bproj": jnp.zeros((1, V), jnp.float32),
    }


# --------------------------------------------------------------------------
# Pure-JAX reference with the same bf16-operand / f32-accumulate math
# --------------------------------------------------------------------------
def reference_forward(tokens, params):
    B, S = tokens.shape
    H = params["whh"].shape[0]
    x = params["embedding"][tokens].astype(jnp.bfloat16)        # (B, S, E)
    x = jnp.transpose(x, (1, 0, 2))                             # (S, B, E)
    wih = params["wih"].astype(jnp.bfloat16)
    whh = params["whh"].astype(jnp.bfloat16)
    bias = params["b"]

    def step(carry, xt):
        h, c = carry
        gates = (jnp.dot(xt, wih, preferred_element_type=jnp.float32)
                 + jnp.dot(h.astype(jnp.bfloat16), whh,
                           preferred_element_type=jnp.float32)
                 + bias)
        i = jax.nn.sigmoid(gates[:, 0 * H:1 * H])
        f = jax.nn.sigmoid(gates[:, 1 * H:2 * H])
        g = jnp.tanh(gates[:, 2 * H:3 * H])
        o = jax.nn.sigmoid(gates[:, 3 * H:4 * H])
        c = f * c + i * g
        h = o * jnp.tanh(c)
        return (h, c), h

    init = (jnp.zeros((B, H), jnp.float32), jnp.zeros((B, H), jnp.float32))
    (h_n, c_n), hs = jax.lax.scan(step, init, x)                # hs (S, B, H) f32
    hs = jnp.transpose(hs, (1, 0, 2))                           # (B, S, H)
    V = params["wproj"].shape[1]
    logits = (jnp.dot(hs.astype(jnp.bfloat16).reshape(B * S, H),
                      params["wproj"].astype(jnp.bfloat16),
                      preferred_element_type=jnp.float32)
              + params["bproj"]).reshape(B, S, V)
    return logits, (h_n[None], c_n[None])


if __name__ == "__main__":
    vocab_size, embedding_size, hidden_size = 50, 16, 32
    batch_size, seq_len = 2, 8

    key = jax.random.PRNGKey(0)
    k_params, k_tok = jax.random.split(key)
    params = init_params(k_params, vocab_size, embedding_size, hidden_size)
    tokens = jax.random.randint(k_tok, (batch_size, seq_len), 0, vocab_size,
                                dtype=jnp.int32)

    ref_logits, (ref_h, ref_c) = reference_forward(tokens, params)

    # Path 1: fused vocab-projection epilogue (default for small V).
    fwd_fused = jax.jit(functools.partial(lstm_lm_forward, fuse_projection=True))
    logits, (h_n, c_n) = fwd_fused(tokens, params)
    jax.block_until_ready((logits, h_n, c_n))
    assert logits.shape == (batch_size, seq_len, vocab_size)
    assert h_n.shape == (1, batch_size, hidden_size)
    assert c_n.shape == (1, batch_size, hidden_size)
    assert jnp.allclose(logits, ref_logits, atol=5e-3), "fused logits mismatch"
    assert jnp.allclose(h_n, ref_h, atol=5e-3), "fused h_n mismatch"
    assert jnp.allclose(c_n, ref_c, atol=5e-3), "fused c_n mismatch"

    # Path 2: separate lane-dense projection kernel (large-V fallback), bf16 hs.
    fwd_split = jax.jit(functools.partial(lstm_lm_forward, fuse_projection=False))
    logits2, (h_n2, c_n2) = fwd_split(tokens, params)
    jax.block_until_ready((logits2, h_n2, c_n2))
    assert jnp.allclose(logits2, ref_logits, atol=5e-3), "split logits mismatch"
    assert jnp.allclose(h_n2, ref_h, atol=5e-3), "split h_n mismatch"
    assert jnp.allclose(c_n2, ref_c, atol=5e-3), "split c_n mismatch"

    # Path 3: S not a multiple of the time block (exercises pad + in-kernel mask).
    seq_len3 = 11
    tokens3 = jax.random.randint(jax.random.PRNGKey(1), (batch_size, seq_len3),
                                 0, vocab_size, dtype=jnp.int32)
    ref_logits3, (ref_h3, ref_c3) = reference_forward(tokens3, params)
    fwd3 = jax.jit(functools.partial(lstm_lm_forward, time_block=8))
    logits3, (h_n3, c_n3) = fwd3(tokens3, params)
    jax.block_until_ready((logits3, h_n3, c_n3))
    assert logits3.shape == (batch_size, seq_len3, vocab_size)
    assert jnp.allclose(logits3, ref_logits3, atol=5e-3), "masked logits mismatch"
    assert jnp.allclose(h_n3, ref_h3, atol=5e-3), "masked h_n mismatch"
    assert jnp.allclose(c_n3, ref_c3, atol=5e-3), "masked c_n mismatch"

    print("KERNEL_OK")
</pallas_src>

<mosaic_0001>
module attributes {stable_mosaic.version = 11 : i64} {
  func.func @lstm_lm_fused_kernel(%arg0: i32, %arg1: i32, %arg2: memref<2x8x16xbf16, #tpu.memory_space<vmem>>, %arg3: memref<16x512xbf16, #tpu.memory_space<vmem>>, %arg4: memref<128x512xbf16, #tpu.memory_space<vmem>>, %arg5: memref<1x512xf32, #tpu.memory_space<vmem>>, %arg6: memref<128x128xbf16, #tpu.memory_space<vmem>>, %arg7: memref<1x128xf32, #tpu.memory_space<vmem>>, %arg8: memref<2x8x128xf32, #tpu.memory_space<vmem>>, %arg9: memref<1x2x128xf32, #tpu.memory_space<vmem>>, %arg10: memref<1x2x128xf32, #tpu.memory_space<vmem>>, %arg11: memref<2x8x512xf32, #tpu.memory_space<vmem>>, %arg12: memref<2x8x128xf32, #tpu.memory_space<vmem>>) attributes {dimension_semantics = [#tpu.dimension_semantics<parallel>, #tpu.dimension_semantics<arbitrary>], iteration_bounds = array<i64: 1, 1>, scalar_prefetch = 0 : i64, scratch_operands = 2 : i64, tpu.core_type = #tpu.core_type<tc>, window_params = [{transform_indices = @transform_0, window_bounds = array<i64: 2, 8, 16>}, {pipeline_mode = #tpu.pipeline_mode<synchronous>, transform_indices = @transform_1, window_bounds = array<i64: 16, 512>}, {pipeline_mode = #tpu.pipeline_mode<synchronous>, transform_indices = @transform_2, window_bounds = array<i64: 128, 512>}, {pipeline_mode = #tpu.pipeline_mode<synchronous>, transform_indices = @transform_3, window_bounds = array<i64: 1, 512>}, {pipeline_mode = #tpu.pipeline_mode<synchronous>, transform_indices = @transform_4, window_bounds = array<i64: 128, 128>}, {pipeline_mode = #tpu.pipeline_mode<synchronous>, transform_indices = @transform_5, window_bounds = array<i64: 1, 128>}, {transform_indices = @transform_6, window_bounds = array<i64: 2, 8, 128>}, {transform_indices = @transform_7, window_bounds = array<i64: 1, 2, 128>}, {transform_indices = @transform_8, window_bounds = array<i64: 1, 2, 128>}]} {
    %c0_i32 = arith.constant 0 : i32
    %0 = arith.cmpi eq, %arg1, %c0_i32 : i32
    %1 = arith.extui %0 : i1 to i32
    %c0_i32_0 = arith.constant 0 : i32
    %2 = arith.cmpi ne, %1, %c0_i32_0 : i32
    scf.if %2 {
      %cst_148 = arith.constant 0.000000e+00 : f32
      %353 = vector.broadcast %cst_148 : f32 to vector<1x2x128xf32>
      %c0_149 = arith.constant 0 : index
      %c0_150 = arith.constant 0 : index
      %c0_151 = arith.constant 0 : index
      %354 = vector.load %arg9[%c0_149, %c0_150, %c0_151] : memref<1x2x128xf32, #tpu.memory_space<vmem>>, vector<1x2x128xf32>
      tpu.vector_store %arg9[%c0_149, %c0_150, %c0_151], %353 {strides = array<i32>} : memref<1x2x128xf32, #tpu.memory_space<vmem>>, vector<1x2x128xf32>,
      %cst_152 = arith.constant 0.000000e+00 : f32
      %355 = vector.broadcast %cst_152 : f32 to vector<1x2x128xf32>
      %c0_153 = arith.constant 0 : index
      %c0_154 = arith.constant 0 : index
      %c0_155 = arith.constant 0 : index
      %356 = vector.load %arg10[%c0_153, %c0_154, %c0_155] : memref<1x2x128xf32, #tpu.memory_space<vmem>>, vector<1x2x128xf32>
      tpu.vector_store %arg10[%c0_153, %c0_154, %c0_155], %355 {strides = array<i32>} : memref<1x2x128xf32, #tpu.memory_space<vmem>>, vector<1x2x128xf32>,
    } else {
    }
    %c0 = arith.constant 0 : index
    %c0_1 = arith.constant 0 : index
    %c0_2 = arith.constant 0 : index
    %3 = vector.load %arg2[%c0, %c0_1, %c0_2] : memref<2x8x16xbf16, #tpu.memory_space<vmem>>, vector<2x8x16xbf16>
    %4 = vector.shape_cast %3 : vector<2x8x16xbf16> to vector<16x16xbf16>
    %c0_3 = arith.constant 0 : index
    %c0_4 = arith.constant 0 : index
    %5 = vector.load %arg3[%c0_3, %c0_4] : memref<16x512xbf16, #tpu.memory_space<vmem>>, vector<16x512xbf16>
    %cst = arith.constant dense<0.000000e+00> : vector<16x512xf32>
    %6 = tpu.matmul %4, %5, %cst {dimension_numbers = #tpu.dot_dimension_numbers<[1], [0], [0], [1], [0, 0, 1, 1], [], []>} : vector<16x16xbf16>, vector<16x512xbf16>, vector<16x512xf32> -> vector<16x512xf32>
    %c0_5 = arith.constant 0 : index
    %c0_6 = arith.constant 0 : index
    %7 = vector.load %arg5[%c0_5, %c0_6] : memref<1x512xf32, #tpu.memory_space<vmem>>, vector<1x512xf32>
    %8 = vector.broadcast %7 : vector<1x512xf32> to vector<16x512xf32>
    %9 = arith.addf %6, %8 : vector<16x512xf32>
    %10 = vector.shape_cast %9 : vector<16x512xf32> to vector<2x8x512xf32>
    %c0_7 = arith.constant 0 : index
    %c0_8 = arith.constant 0 : index
    %c0_9 = arith.constant 0 : index
    %11 = vector.load %arg11[%c0_7, %c0_8, %c0_9] : memref<2x8x512xf32, #tpu.memory_space<vmem>>, vector<2x8x512xf32>
    tpu.vector_store %arg11[%c0_7, %c0_8, %c0_9], %10 {strides = array<i32>} : memref<2x8x512xf32, #tpu.memory_space<vmem>>, vector<2x8x512xf32>,
    %c0_10 = arith.constant 0 : index
    %c0_11 = arith.constant 0 : index
    %12 = vector.load %arg4[%c0_10, %c0_11] : memref<128x512xbf16, #tpu.memory_space<vmem>>, vector<128x512xbf16>
    %c0_12 = arith.constant 0 : index
    %c0_13 = arith.constant 0 : index
    %c0_14 = arith.constant 0 : index
    %13 = vector.load %arg9[%c0_12, %c0_13, %c0_14] : memref<1x2x128xf32, #tpu.memory_space<vmem>>, vector<1x2x128xf32>
    %14 = vector.shape_cast %13 : vector<1x2x128xf32> to vector<2x128xf32>
    %c0_15 = arith.constant 0 : index
    %c0_16 = arith.constant 0 : index
    %c0_17 = arith.constant 0 : index
    %15 = vector.load %arg10[%c0_15, %c0_16, %c0_17] : memref<1x2x128xf32, #tpu.memory_space<vmem>>, vector<1x2x128xf32>
    %16 = vector.shape_cast %15 : vector<1x2x128xf32> to vector<2x128xf32>
    %c0_i32_18 = arith.constant 0 : i32
    %c0_19 = arith.constant 0 : index
    %17 = arith.index_cast %c0_i32_18 : i32 to index
    %c0_20 = arith.constant 0 : index
    %18 = vector.load %arg11[%c0_19, %17, %c0_20] : memref<2x8x512xf32, #tpu.memory_space<vmem>>, vector<2x1x512xf32>
    %19 = vector.shape_cast %18 : vector<2x1x512xf32> to vector<2x512xf32>
    %20 = arith.truncf %14 : vector<2x128xf32> to vector<2x128xbf16>
    %cst_21 = arith.constant dense<0.000000e+00> : vector<2x512xf32>
    %21 = tpu.matmul %20, %12, %cst_21 {dimension_numbers = #tpu.dot_dimension_numbers<[1], [0], [0], [1], [0, 0, 1, 1], [], []>} : vector<2x128xbf16>, vector<128x512xbf16>, vector<2x512xf32> -> vector<2x512xf32>
    %22 = arith.addf %19, %21 : vector<2x512xf32>
    %23 = vector.extract_strided_slice %22 {offsets = [0, 0], sizes = [2, 128], strides = [1, 1]} : vector<2x512xf32> to vector<2x128xf32>
    %cst_22 = arith.constant 5.000000e-01 : f32
    %24 = vector.broadcast %cst_22 : f32 to vector<2x128xf32>
    %25 = arith.mulf %24, %23 : vector<2x128xf32>
    %26 = math.tanh %25 : vector<2x128xf32>
    %cst_23 = arith.constant 5.000000e-01 : f32
    %27 = vector.broadcast %cst_23 : f32 to vector<2x128xf32>
    %28 = arith.mulf %27, %26 : vector<2x128xf32>
    %cst_24 = arith.constant 5.000000e-01 : f32
    %29 = vector.broadcast %cst_24 : f32 to vector<2x128xf32>
    %30 = arith.addf %28, %29 : vector<2x128xf32>
    %31 = vector.extract_strided_slice %22 {offsets = [0, 128], sizes = [2, 128], strides = [1, 1]} : vector<2x512xf32> to vector<2x128xf32>
    %cst_25 = arith.constant 5.000000e-01 : f32
    %32 = vector.broadcast %cst_25 : f32 to vector<2x128xf32>
    %33 = arith.mulf %32, %31 : vector<2x128xf32>
    %34 = math.tanh %33 : vector<2x128xf32>
    %cst_26 = arith.constant 5.000000e-01 : f32
    %35 = vector.broadcast %cst_26 : f32 to vector<2x128xf32>
    %36 = arith.mulf %35, %34 : vector<2x128xf32>
    %cst_27 = arith.constant 5.000000e-01 : f32
    %37 = vector.broadcast %cst_27 : f32 to vector<2x128xf32>
    %38 = arith.addf %36, %37 : vector<2x128xf32>
    %39 = vector.extract_strided_slice %22 {offsets = [0, 256], sizes = [2, 128], strides = [1, 1]} : vector<2x512xf32> to vector<2x128xf32>
    %40 = math.tanh %39 : vector<2x128xf32>
    %41 = vector.extract_strided_slice %22 {offsets = [0, 384], sizes = [2, 128], strides = [1, 1]} : vector<2x512xf32> to vector<2x128xf32>
    %cst_28 = arith.constant 5.000000e-01 : f32
    %42 = vector.broadcast %cst_28 : f32 to vector<2x128xf32>
    %43 = arith.mulf %42, %41 : vector<2x128xf32>
    %44 = math.tanh %43 : vector<2x128xf32>
    %cst_29 = arith.constant 5.000000e-01 : f32
    %45 = vector.broadcast %cst_29 : f32 to vector<2x128xf32>
    %46 = arith.mulf %45, %44 : vector<2x128xf32>
    %cst_30 = arith.constant 5.000000e-01 : f32
    %47 = vector.broadcast %cst_30 : f32 to vector<2x128xf32>
    %48 = arith.addf %46, %47 : vector<2x128xf32>
    %49 = arith.mulf %38, %16 : vector<2x128xf32>
    %50 = arith.mulf %30, %40 : vector<2x128xf32>
    %51 = arith.addf %49, %50 : vector<2x128xf32>
    %52 = math.tanh %51 : vector<2x128xf32>
    %53 = arith.mulf %48, %52 : vector<2x128xf32>
    %54 = vector.shape_cast %53 : vector<2x128xf32> to vector<2x1x128xf32>
    %c0_31 = arith.constant 0 : index
    %55 = arith.index_cast %c0_i32_18 : i32 to index
    %c0_32 = arith.constant 0 : index
    %56 = vector.load %arg12[%c0_31, %55, %c0_32] : memref<2x8x128xf32, #tpu.memory_space<vmem>>, vector<2x1x128xf32>
    tpu.vector_store %arg12[%c0_31, %55, %c0_32], %54 {strides = array<i32>} : memref<2x8x128xf32, #tpu.memory_space<vmem>>, vector<2x1x128xf32>,
    %c1_i32 = arith.constant 1 : i32
    %c0_33 = arith.constant 0 : index
    %57 = arith.index_cast %c1_i32 : i32 to index
    %c0_34 = arith.constant 0 : index
    %58 = vector.load %arg11[%c0_33, %57, %c0_34] : memref<2x8x512xf32, #tpu.memory_space<vmem>>, vector<2x1x512xf32>
    %59 = vector.shape_cast %58 : vector<2x1x512xf32> to vector<2x512xf32>
    %60 = arith.truncf %53 : vector<2x128xf32> to vector<2x128xbf16>
    %cst_35 = arith.constant dense<0.000000e+00> : vector<2x512xf32>
    %61 = tpu.matmul %60, %12, %cst_35 {dimension_numbers = #tpu.dot_dimension_numbers<[1], [0], [0], [1], [0, 0, 1, 1], [], []>} : vector<2x128xbf16>, vector<128x512xbf16>, vector<2x512xf32> -> vector<2x512xf32>
    %62 = arith.addf %59, %61 : vector<2x512xf32>
    %63 = vector.extract_strided_slice %62 {offsets = [0, 0], sizes = [2, 128], strides = [1, 1]} : vector<2x512xf32> to vector<2x128xf32>
    %cst_36 = arith.constant 5.000000e-01 : f32
    %64 = vector.broadcast %cst_36 : f32 to vector<2x128xf32>
    %65 = arith.mulf %64, %63 : vector<2x128xf32>
    %66 = math.tanh %65 : vector<2x128xf32>
    %cst_37 = arith.constant 5.000000e-01 : f32
    %67 = vector.broadcast %cst_37 : f32 to vector<2x128xf32>
    %68 = arith.mulf %67, %66 : vector<2x128xf32>
    %cst_38 = arith.constant 5.000000e-01 : f32
    %69 = vector.broadcast %cst_38 : f32 to vector<2x128xf32>
    %70 = arith.addf %68, %69 : vector<2x128xf32>
    %71 = vector.extract_strided_slice %62 {offsets = [0, 128], sizes = [2, 128], strides = [1, 1]} : vector<2x512xf32> to vector<2x128xf32>
    %cst_39 = arith.constant 5.000000e-01 : f32
    %72 = vector.broadcast %cst_39 : f32 to vector<2x128xf32>
    %73 = arith.mulf %72, %71 : vector<2x128xf32>
    %74 = math.tanh %73 : vector<2x128xf32>
    %cst_40 = arith.constant 5.000000e-01 : f32
    %75 = vector.broadcast %cst_40 : f32 to vector<2x128xf32>
    %76 = arith.mulf %75, %74 : vector<2x128xf32>
    %cst_41 = arith.constant 5.000000e-01 : f32
    %77 = vector.broadcast %cst_41 : f32 to vector<2x128xf32>
    %78 = arith.addf %76, %77 : vector<2x128xf32>
    %79 = vector.extract_strided_slice %62 {offsets = [0, 256], sizes = [2, 128], strides = [1, 1]} : vector<2x512xf32> to vector<2x128xf32>
    %80 = math.tanh %79 : vector<2x128xf32>
    %81 = vector.extract_strided_slice %62 {offsets = [0, 384], sizes = [2, 128], strides = [1, 1]} : vector<2x512xf32> to vector<2x128xf32>
    %cst_42 = arith.constant 5.000000e-01 : f32
    %82 = vector.broadcast %cst_42 : f32 to vector<2x128xf32>
    %83 = arith.mulf %82, %81 : vector<2x128xf32>
    %84 = math.tanh %83 : vector<2x128xf32>
    %cst_43 = arith.constant 5.000000e-01 : f32
    %85 = vector.broadcast %cst_43 : f32 to vector<2x128xf32>
    %86 = arith.mulf %85, %84 : vector<2x128xf32>
    %cst_44 = arith.constant 5.000000e-01 : f32
    %87 = vector.broadcast %cst_44 : f32 to vector<2x128xf32>
    %88 = arith.addf %86, %87 : vector<2x128xf32>
    %89 = arith.mulf %78, %51 : vector<2x128xf32>
    %90 = arith.mulf %70, %80 : vector<2x128xf32>
    %91 = arith.addf %89, %90 : vector<2x128xf32>
    %92 = math.tanh %91 : vector<2x128xf32>
    %93 = arith.mulf %88, %92 : vector<2x128xf32>
    %94 = vector.shape_cast %93 : vector<2x128xf32> to vector<2x1x128xf32>
    %c0_45 = arith.constant 0 : index
    %95 = arith.index_cast %c1_i32 : i32 to index
    %c0_46 = arith.constant 0 : index
    %96 = vector.load %arg12[%c0_45, %95, %c0_46] : memref<2x8x128xf32, #tpu.memory_space<vmem>>, vector<2x1x128xf32>
    tpu.vector_store %arg12[%c0_45, %95, %c0_46], %94 {strides = array<i32>} : memref<2x8x128xf32, #tpu.memory_space<vmem>>, vector<2x1x128xf32>,
    %c2_i32 = arith.constant 2 : i32
    %c0_47 = arith.constant 0 : index
    %97 = arith.index_cast %c2_i32 : i32 to index
    %c0_48 = arith.constant 0 : index
    %98 = vector.load %arg11[%c0_47, %97, %c0_48] : memref<2x8x512xf32, #tpu.memory_space<vmem>>, vector<2x1x512xf32>
    %99 = vector.shape_cast %98 : vector<2x1x512xf32> to vector<2x512xf32>
    %100 = arith.truncf %93 : vector<2x128xf32> to vector<2x128xbf16>
    %cst_49 = arith.constant dense<0.000000e+00> : vector<2x512xf32>
    %101 = tpu.matmul %100, %12, %cst_49 {dimension_numbers = #tpu.dot_dimension_numbers<[1], [0], [0], [1], [0, 0, 1, 1], [], []>} : vector<2x128xbf16>, vector<128x512xbf16>, vector<2x512xf32> -> vector<2x512xf32>
    %102 = arith.addf %99, %101 : vector<2x512xf32>
    %103 = vector.extract_strided_slice %102 {offsets = [0, 0], sizes = [2, 128], strides = [1, 1]} : vector<2x512xf32> to vector<2x128xf32>
    %cst_50 = arith.constant 5.000000e-01 : f32
    %104 = vector.broadcast %cst_50 : f32 to vector<2x128xf32>
    %105 = arith.mulf %104, %103 : vector<2x128xf32>
    %106 = math.tanh %105 : vector<2x128xf32>
    %cst_51 = arith.constant 5.000000e-01 : f32
    %107 = vector.broadcast %cst_51 : f32 to vector<2x128xf32>
    %108 = arith.mulf %107, %106 : vector<2x128xf32>
    %cst_52 = arith.constant 5.000000e-01 : f32
    %109 = vector.broadcast %cst_52 : f32 to vector<2x128xf32>
    %110 = arith.addf %108, %109 : vector<2x128xf32>
    %111 = vector.extract_strided_slice %102 {offsets = [0, 128], sizes = [2, 128], strides = [1, 1]} : vector<2x512xf32> to vector<2x128xf32>
    %cst_53 = arith.constant 5.000000e-01 : f32
    %112 = vector.broadcast %cst_53 : f32 to vector<2x128xf32>
    %113 = arith.mulf %112, %111 : vector<2x128xf32>
    %114 = math.tanh %113 : vector<2x128xf32>
    %cst_54 = arith.constant 5.000000e-01 : f32
    %115 = vector.broadcast %cst_54 : f32 to vector<2x128xf32>
    %116 = arith.mulf %115, %114 : vector<2x128xf32>
    %cst_55 = arith.constant 5.000000e-01 : f32
    %117 = vector.broadcast %cst_55 : f32 to vector<2x128xf32>
    %118 = arith.addf %116, %117 : vector<2x128xf32>
    %119 = vector.extract_strided_slice %102 {offsets = [0, 256], sizes = [2, 128], strides = [1, 1]} : vector<2x512xf32> to vector<2x128xf32>
    %120 = math.tanh %119 : vector<2x128xf32>
    %121 = vector.extract_strided_slice %102 {offsets = [0, 384], sizes = [2, 128], strides = [1, 1]} : vector<2x512xf32> to vector<2x128xf32>
    %cst_56 = arith.constant 5.000000e-01 : f32
    %122 = vector.broadcast %cst_56 : f32 to vector<2x128xf32>
    %123 = arith.mulf %122, %121 : vector<2x128xf32>
    %124 = math.tanh %123 : vector<2x128xf32>
    %cst_57 = arith.constant 5.000000e-01 : f32
    %125 = vector.broadcast %cst_57 : f32 to vector<2x128xf32>
    %126 = arith.mulf %125, %124 : vector<2x128xf32>
    %cst_58 = arith.constant 5.000000e-01 : f32
    %127 = vector.broadcast %cst_58 : f32 to vector<2x128xf32>
    %128 = arith.addf %126, %127 : vector<2x128xf32>
    %129 = arith.mulf %118, %91 : vector<2x128xf32>
    %130 = arith.mulf %110, %120 : vector<2x128xf32>
    %131 = arith.addf %129, %130 : vector<2x128xf32>
    %132 = math.tanh %131 : vector<2x128xf32>
    %133 = arith.mulf %128, %132 : vector<2x128xf32>
    %134 = vector.shape_cast %133 : vector<2x128xf32> to vector<2x1x128xf32>
    %c0_59 = arith.constant 0 : index
    %135 = arith.index_cast %c2_i32 : i32 to index
    %c0_60 = arith.constant 0 : index
    %136 = vector.load %arg12[%c0_59, %135, %c0_60] : memref<2x8x128xf32, #tpu.memory_space<vmem>>, vector<2x1x128xf32>
    tpu.vector_store %arg12[%c0_59, %135, %c0_60], %134 {strides = array<i32>} : memref<2x8x128xf32, #tpu.memory_space<vmem>>, vector<2x1x128xf32>,
    %c3_i32 = arith.constant 3 : i32
    %c0_61 = arith.constant 0 : index
    %137 = arith.index_cast %c3_i32 : i32 to index
    %c0_62 = arith.constant 0 : index
    %138 = vector.load %arg11[%c0_61, %137, %c0_62] : memref<2x8x512xf32, #tpu.memory_space<vmem>>, vector<2x1x512xf32>
    %139 = vector.shape_cast %138 : vector<2x1x512xf32> to vector<2x512xf32>
    %140 = arith.truncf %133 : vector<2x128xf32> to vector<2x128xbf16>
    %cst_63 = arith.constant dense<0.000000e+00> : vector<2x512xf32>
    %141 = tpu.matmul %140, %12, %cst_63 {dimension_numbers = #tpu.dot_dimension_numbers<[1], [0], [0], [1], [0, 0, 1, 1], [], []>} : vector<2x128xbf16>, vector<128x512xbf16>, vector<2x512xf32> -> vector<2x512xf32>
    %142 = arith.addf %139, %141 : vector<2x512xf32>
    %143 = vector.extract_strided_slice %142 {offsets = [0, 0], sizes = [2, 128], strides = [1, 1]} : vector<2x512xf32> to vector<2x128xf32>
    %cst_64 = arith.constant 5.000000e-01 : f32
    %144 = vector.broadcast %cst_64 : f32 to vector<2x128xf32>
    %145 = arith.mulf %144, %143 : vector<2x128xf32>
    %146 = math.tanh %145 : vector<2x128xf32>
    %cst_65 = arith.constant 5.000000e-01 : f32
    %147 = vector.broadcast %cst_65 : f32 to vector<2x128xf32>
    %148 = arith.mulf %147, %146 : vector<2x128xf32>
    %cst_66 = arith.constant 5.000000e-01 : f32
    %149 = vector.broadcast %cst_66 : f32 to vector<2x128xf32>
    %150 = arith.addf %148, %149 : vector<2x128xf32>
    %151 = vector.extract_strided_slice %142 {offsets = [0, 128], sizes = [2, 128], strides = [1, 1]} : vector<2x512xf32> to vector<2x128xf32>
    %cst_67 = arith.constant 5.000000e-01 : f32
    %152 = vector.broadcast %cst_67 : f32 to vector<2x128xf32>
    %153 = arith.mulf %152, %151 : vector<2x128xf32>
    %154 = math.tanh %153 : vector<2x128xf32>
    %cst_68 = arith.constant 5.000000e-01 : f32
    %155 = vector.broadcast %cst_68 : f32 to vector<2x128xf32>
    %156 = arith.mulf %155, %154 : vector<2x128xf32>
    %cst_69 = arith.constant 5.000000e-01 : f32
    %157 = vector.broadcast %cst_69 : f32 to vector<2x128xf32>
    %158 = arith.addf %156, %157 : vector<2x128xf32>
    %159 = vector.extract_strided_slice %142 {offsets = [0, 256], sizes = [2, 128], strides = [1, 1]} : vector<2x512xf32> to vector<2x128xf32>
    %160 = math.tanh %159 : vector<2x128xf32>
    %161 = vector.extract_strided_slice %142 {offsets = [0, 384], sizes = [2, 128], strides = [1, 1]} : vector<2x512xf32> to vector<2x128xf32>
    %cst_70 = arith.constant 5.000000e-01 : f32
    %162 = vector.broadcast %cst_70 : f32 to vector<2x128xf32>
    %163 = arith.mulf %162, %161 : vector<2x128xf32>
    %164 = math.tanh %163 : vector<2x128xf32>
    %cst_71 = arith.constant 5.000000e-01 : f32
    %165 = vector.broadcast %cst_71 : f32 to vector<2x128xf32>
    %166 = arith.mulf %165, %164 : vector<2x128xf32>
    %cst_72 = arith.constant 5.000000e-01 : f32
    %167 = vector.broadcast %cst_72 : f32 to vector<2x128xf32>
    %168 = arith.addf %166, %167 : vector<2x128xf32>
    %169 = arith.mulf %158, %131 : vector<2x128xf32>
    %170 = arith.mulf %150, %160 : vector<2x128xf32>
    %171 = arith.addf %169, %170 : vector<2x128xf32>
    %172 = math.tanh %171 : vector<2x128xf32>
    %173 = arith.mulf %168, %172 : vector<2x128xf32>
    %174 = vector.shape_cast %173 : vector<2x128xf32> to vector<2x1x128xf32>
    %c0_73 = arith.constant 0 : index
    %175 = arith.index_cast %c3_i32 : i32 to index
    %c0_74 = arith.constant 0 : index
    %176 = vector.load %arg12[%c0_73, %175, %c0_74] : memref<2x8x128xf32, #tpu.memory_space<vmem>>, vector<2x1x128xf32>
    tpu.vector_store %arg12[%c0_73, %175, %c0_74], %174 {strides = array<i32>} : memref<2x8x128xf32, #tpu.memory_space<vmem>>, vector<2x1x128xf32>,
    %c4_i32 = arith.constant 4 : i32
    %c0_75 = arith.constant 0 : index
    %177 = arith.index_cast %c4_i32 : i32 to index
    %c0_76 = arith.constant 0 : index
    %178 = vector.load %arg11[%c0_75, %177, %c0_76] : memref<2x8x512xf32, #tpu.memory_space<vmem>>, vector<2x1x512xf32>
    %179 = vector.shape_cast %178 : vector<2x1x512xf32> to vector<2x512xf32>
    %180 = arith.truncf %173 : vector<2x128xf32> to vector<2x128xbf16>
    %cst_77 = arith.constant dense<0.000000e+00> : vector<2x512xf32>
    %181 = tpu.matmul %180, %12, %cst_77 {dimension_numbers = #tpu.dot_dimension_numbers<[1], [0], [0], [1], [0, 0, 1, 1], [], []>} : vector<2x128xbf16>, vector<128x512xbf16>, vector<2x512xf32> -> vector<2x512xf32>
    %182 = arith.addf %179, %181 : vector<2x512xf32>
    %183 = vector.extract_strided_slice %182 {offsets = [0, 0], sizes = [2, 128], strides = [1, 1]} : vector<2x512xf32> to vector<2x128xf32>
    %cst_78 = arith.constant 5.000000e-01 : f32
    %184 = vector.broadcast %cst_78 : f32 to vector<2x128xf32>
    %185 = arith.mulf %184, %183 : vector<2x128xf32>
    %186 = math.tanh %185 : vector<2x128xf32>
    %cst_79 = arith.constant 5.000000e-01 : f32
    %187 = vector.broadcast %cst_79 : f32 to vector<2x128xf32>
    %188 = arith.mulf %187, %186 : vector<2x128xf32>
    %cst_80 = arith.constant 5.000000e-01 : f32
    %189 = vector.broadcast %cst_80 : f32 to vector<2x128xf32>
    %190 = arith.addf %188, %189 : vector<2x128xf32>
    %191 = vector.extract_strided_slice %182 {offsets = [0, 128], sizes = [2, 128], strides = [1, 1]} : vector<2x512xf32> to vector<2x128xf32>
    %cst_81 = arith.constant 5.000000e-01 : f32
    %192 = vector.broadcast %cst_81 : f32 to vector<2x128xf32>
    %193 = arith.mulf %192, %191 : vector<2x128xf32>
    %194 = math.tanh %193 : vector<2x128xf32>
    %cst_82 = arith.constant 5.000000e-01 : f32
    %195 = vector.broadcast %cst_82 : f32 to vector<2x128xf32>
    %196 = arith.mulf %195, %194 : vector<2x128xf32>
    %cst_83 = arith.constant 5.000000e-01 : f32
    %197 = vector.broadcast %cst_83 : f32 to vector<2x128xf32>
    %198 = arith.addf %196, %197 : vector<2x128xf32>
    %199 = vector.extract_strided_slice %182 {offsets = [0, 256], sizes = [2, 128], strides = [1, 1]} : vector<2x512xf32> to vector<2x128xf32>
    %200 = math.tanh %199 : vector<2x128xf32>
    %201 = vector.extract_strided_slice %182 {offsets = [0, 384], sizes = [2, 128], strides = [1, 1]} : vector<2x512xf32> to vector<2x128xf32>
    %cst_84 = arith.constant 5.000000e-01 : f32
    %202 = vector.broadcast %cst_84 : f32 to vector<2x128xf32>
    %203 = arith.mulf %202, %201 : vector<2x128xf32>
    %204 = math.tanh %203 : vector<2x128xf32>
    %cst_85 = arith.constant 5.000000e-01 : f32
    %205 = vector.broadcast %cst_85 : f32 to vector<2x128xf32>
    %206 = arith.mulf %205, %204 : vector<2x128xf32>
    %cst_86 = arith.constant 5.000000e-01 : f32
    %207 = vector.broadcast %cst_86 : f32 to vector<2x128xf32>
    %208 = arith.addf %206, %207 : vector<2x128xf32>
    %209 = arith.mulf %198, %171 : vector<2x128xf32>
    %210 = arith.mulf %190, %200 : vector<2x128xf32>
    %211 = arith.addf %209, %210 : vector<2x128xf32>
    %212 = math.tanh %211 : vector<2x128xf32>
    %213 = arith.mulf %208, %212 : vector<2x128xf32>
    %214 = vector.shape_cast %213 : vector<2x128xf32> to vector<2x1x128xf32>
    %c0_87 = arith.constant 0 : index
    %215 = arith.index_cast %c4_i32 : i32 to index
    %c0_88 = arith.constant 0 : index
    %216 = vector.load %arg12[%c0_87, %215, %c0_88] : memref<2x8x128xf32, #tpu.memory_space<vmem>>, vector<2x1x128xf32>
    tpu.vector_store %arg12[%c0_87, %215, %c0_88], %214 {strides = array<i32>} : memref<2x8x128xf32, #tpu.memory_space<vmem>>, vector<2x1x128xf32>,
    %c5_i32 = arith.constant 5 : i32
    %c0_89 = arith.constant 0 : index
    %217 = arith.index_cast %c5_i32 : i32 to index
    %c0_90 = arith.constant 0 : index
    %218 = vector.load %arg11[%c0_89, %217, %c0_90] : memref<2x8x512xf32, #tpu.memory_space<vmem>>, vector<2x1x512xf32>
    %219 = vector.shape_cast %218 : vector<2x1x512xf32> to vector<2x512xf32>
    %220 = arith.truncf %213 : vector<2x128xf32> to vector<2x128xbf16>
    %cst_91 = arith.constant dense<0.000000e+00> : vector<2x512xf32>
    %221 = tpu.matmul %220, %12, %cst_91 {dimension_numbers = #tpu.dot_dimension_numbers<[1], [0], [0], [1], [0, 0, 1, 1], [], []>} : vector<2x128xbf16>, vector<128x512xbf16>, vector<2x512xf32> -> vector<2x512xf32>
    %222 = arith.addf %219, %221 : vector<2x512xf32>
    %223 = vector.extract_strided_slice %222 {offsets = [0, 0], sizes = [2, 128], strides = [1, 1]} : vector<2x512xf32> to vector<2x128xf32>
    %cst_92 = arith.constant 5.000000e-01 : f32
    %224 = vector.broadcast %cst_92 : f32 to vector<2x128xf32>
    %225 = arith.mulf %224, %223 : vector<2x128xf32>
    %226 = math.tanh %225 : vector<2x128xf32>
    %cst_93 = arith.constant 5.000000e-01 : f32
    %227 = vector.broadcast %cst_93 : f32 to vector<2x128xf32>
    %228 = arith.mulf %227, %226 : vector<2x128xf32>
    %cst_94 = arith.constant 5.000000e-01 : f32
    %229 = vector.broadcast %cst_94 : f32 to vector<2x128xf32>
    %230 = arith.addf %228, %229 : vector<2x128xf32>
    %231 = vector.extract_strided_slice %222 {offsets = [0, 128], sizes = [2, 128], strides = [1, 1]} : vector<2x512xf32> to vector<2x128xf32>
    %cst_95 = arith.constant 5.000000e-01 : f32
    %232 = vector.broadcast %cst_95 : f32 to vector<2x128xf32>
    %233 = arith.mulf %232, %231 : vector<2x128xf32>
    %234 = math.tanh %233 : vector<2x128xf32>
    %cst_96 = arith.constant 5.000000e-01 : f32
    %235 = vector.broadcast %cst_96 : f32 to vector<2x128xf32>
    %236 = arith.mulf %235, %234 : vector<2x128xf32>
    %cst_97 = arith.constant 5.000000e-01 : f32
    %237 = vector.broadcast %cst_97 : f32 to vector<2x128xf32>
    %238 = arith.addf %236, %237 : vector<2x128xf32>
    %239 = vector.extract_strided_slice %222 {offsets = [0, 256], sizes = [2, 128], strides = [1, 1]} : vector<2x512xf32> to vector<2x128xf32>
    %240 = math.tanh %239 : vector<2x128xf32>
    %241 = vector.extract_strided_slice %222 {offsets = [0, 384], sizes = [2, 128], strides = [1, 1]} : vector<2x512xf32> to vector<2x128xf32>
    %cst_98 = arith.constant 5.000000e-01 : f32
    %242 = vector.broadcast %cst_98 : f32 to vector<2x128xf32>
    %243 = arith.mulf %242, %241 : vector<2x128xf32>
    %244 = math.tanh %243 : vector<2x128xf32>
    %cst_99 = arith.constant 5.000000e-01 : f32
    %245 = vector.broadcast %cst_99 : f32 to vector<2x128xf32>
    %246 = arith.mulf %245, %244 : vector<2x128xf32>
    %cst_100 = arith.constant 5.000000e-01 : f32
    %247 = vector.broadcast %cst_100 : f32 to vector<2x128xf32>
    %248 = arith.addf %246, %247 : vector<2x128xf32>
    %249 = arith.mulf %238, %211 : vector<2x128xf32>
    %250 = arith.mulf %230, %240 : vector<2x128xf32>
    %251 = arith.addf %249, %250 : vector<2x128xf32>
    %252 = math.tanh %251 : vector<2x128xf32>
    %253 = arith.mulf %248, %252 : vector<2x128xf32>
    %254 = vector.shape_cast %253 : vector<2x128xf32> to vector<2x1x128xf32>
    %c0_101 = arith.constant 0 : index
    %255 = arith.index_cast %c5_i32 : i32 to index
    %c0_102 = arith.constant 0 : index
    %256 = vector.load %arg12[%c0_101, %255, %c0_102] : memref<2x8x128xf32, #tpu.memory_space<vmem>>, vector<2x1x128xf32>
    tpu.vector_store %arg12[%c0_101, %255, %c0_102], %254 {strides = array<i32>} : memref<2x8x128xf32, #tpu.memory_space<vmem>>, vector<2x1x128xf32>,
    %c6_i32 = arith.constant 6 : i32
    %c0_103 = arith.constant 0 : index
    %257 = arith.index_cast %c6_i32 : i32 to index
    %c0_104 = arith.constant 0 : index
    %258 = vector.load %arg11[%c0_103, %257, %c0_104] : memref<2x8x512xf32, #tpu.memory_space<vmem>>, vector<2x1x512xf32>
    %259 = vector.shape_cast %258 : vector<2x1x512xf32> to vector<2x512xf32>
    %260 = arith.truncf %253 : vector<2x128xf32> to vector<2x128xbf16>
    %cst_105 = arith.constant dense<0.000000e+00> : vector<2x512xf32>
    %261 = tpu.matmul %260, %12, %cst_105 {dimension_numbers = #tpu.dot_dimension_numbers<[1], [0], [0], [1], [0, 0, 1, 1], [], []>} : vector<2x128xbf16>, vector<128x512xbf16>, vector<2x512xf32> -> vector<2x512xf32>
    %262 = arith.addf %259, %261 : vector<2x512xf32>
    %263 = vector.extract_strided_slice %262 {offsets = [0, 0], sizes = [2, 128], strides = [1, 1]} : vector<2x512xf32> to vector<2x128xf32>
    %cst_106 = arith.constant 5.000000e-01 : f32
    %264 = vector.broadcast %cst_106 : f32 to vector<2x128xf32>
    %265 = arith.mulf %264, %263 : vector<2x128xf32>
    %266 = math.tanh %265 : vector<2x128xf32>
    %cst_107 = arith.constant 5.000000e-01 : f32
    %267 = vector.broadcast %cst_107 : f32 to vector<2x128xf32>
    %268 = arith.mulf %267, %266 : vector<2x128xf32>
    %cst_108 = arith.constant 5.000000e-01 : f32
    %269 = vector.broadcast %cst_108 : f32 to vector<2x128xf32>
    %270 = arith.addf %268, %269 : vector<2x128xf32>
    %271 = vector.extract_strided_slice %262 {offsets = [0, 128], sizes = [2, 128], strides = [1, 1]} : vector<2x512xf32> to vector<2x128xf32>
    %cst_109 = arith.constant 5.000000e-01 : f32
    %272 = vector.broadcast %cst_109 : f32 to vector<2x128xf32>
    %273 = arith.mulf %272, %271 : vector<2x128xf32>
    %274 = math.tanh %273 : vector<2x128xf32>
    %cst_110 = arith.constant 5.000000e-01 : f32
    %275 = vector.broadcast %cst_110 : f32 to vector<2x128xf32>
    %276 = arith.mulf %275, %274 : vector<2x128xf32>
    %cst_111 = arith.constant 5.000000e-01 : f32
    %277 = vector.broadcast %cst_111 : f32 to vector<2x128xf32>
    %278 = arith.addf %276, %277 : vector<2x128xf32>
    %279 = vector.extract_strided_slice %262 {offsets = [0, 256], sizes = [2, 128], strides = [1, 1]} : vector<2x512xf32> to vector<2x128xf32>
    %280 = math.tanh %279 : vector<2x128xf32>
    %281 = vector.extract_strided_slice %262 {offsets = [0, 384], sizes = [2, 128], strides = [1, 1]} : vector<2x512xf32> to vector<2x128xf32>
    %cst_112 = arith.constant 5.000000e-01 : f32
    %282 = vector.broadcast %cst_112 : f32 to vector<2x128xf32>
    %283 = arith.mulf %282, %281 : vector<2x128xf32>
    %284 = math.tanh %283 : vector<2x128xf32>
    %cst_113 = arith.constant 5.000000e-01 : f32
    %285 = vector.broadcast %cst_113 : f32 to vector<2x128xf32>
    %286 = arith.mulf %285, %284 : vector<2x128xf32>
    %cst_114 = arith.constant 5.000000e-01 : f32
    %287 = vector.broadcast %cst_114 : f32 to vector<2x128xf32>
    %288 = arith.addf %286, %287 : vector<2x128xf32>
    %289 = arith.mulf %278, %251 : vector<2x128xf32>
    %290 = arith.mulf %270, %280 : vector<2x128xf32>
    %291 = arith.addf %289, %290 : vector<2x128xf32>
    %292 = math.tanh %291 : vector<2x128xf32>
    %293 = arith.mulf %288, %292 : vector<2x128xf32>
    %294 = vector.shape_cast %293 : vector<2x128xf32> to vector<2x1x128xf32>
    %c0_115 = arith.constant 0 : index
    %295 = arith.index_cast %c6_i32 : i32 to index
    %c0_116 = arith.constant 0 : index
    %296 = vector.load %arg12[%c0_115, %295, %c0_116] : memref<2x8x128xf32, #tpu.memory_space<vmem>>, vector<2x1x128xf32>
    tpu.vector_store %arg12[%c0_115, %295, %c0_116], %294 {strides = array<i32>} : memref<2x8x128xf32, #tpu.memory_space<vmem>>, vector<2x1x128xf32>,
    %c7_i32 = arith.constant 7 : i32
    %c0_117 = arith.constant 0 : index
    %297 = arith.index_cast %c7_i32 : i32 to index
    %c0_118 = arith.constant 0 : index
    %298 = vector.load %arg11[%c0_117, %297, %c0_118] : memref<2x8x512xf32, #tpu.memory_space<vmem>>, vector<2x1x512xf32>
    %299 = vector.shape_cast %298 : vector<2x1x512xf32> to vector<2x512xf32>
    %300 = arith.truncf %293 : vector<2x128xf32> to vector<2x128xbf16>
    %cst_119 = arith.constant dense<0.000000e+00> : vector<2x512xf32>
    %301 = tpu.matmul %300, %12, %cst_119 {dimension_numbers = #tpu.dot_dimension_numbers<[1], [0], [0], [1], [0, 0, 1, 1], [], []>} : vector<2x128xbf16>, vector<128x512xbf16>, vector<2x512xf32> -> vector<2x512xf32>
    %302 = arith.addf %299, %301 : vector<2x512xf32>
    %303 = vector.extract_strided_slice %302 {offsets = [0, 0], sizes = [2, 128], strides = [1, 1]} : vector<2x512xf32> to vector<2x128xf32>
    %cst_120 = arith.constant 5.000000e-01 : f32
    %304 = vector.broadcast %cst_120 : f32 to vector<2x128xf32>
    %305 = arith.mulf %304, %303 : vector<2x128xf32>
    %306 = math.tanh %305 : vector<2x128xf32>
    %cst_121 = arith.constant 5.000000e-01 : f32
    %307 = vector.broadcast %cst_121 : f32 to vector<2x128xf32>
    %308 = arith.mulf %307, %306 : vector<2x128xf32>
    %cst_122 = arith.constant 5.000000e-01 : f32
    %309 = vector.broadcast %cst_122 : f32 to vector<2x128xf32>
    %310 = arith.addf %308, %309 : vector<2x128xf32>
    %311 = vector.extract_strided_slice %302 {offsets = [0, 128], sizes = [2, 128], strides = [1, 1]} : vector<2x512xf32> to vector<2x128xf32>
    %cst_123 = arith.constant 5.000000e-01 : f32
    %312 = vector.broadcast %cst_123 : f32 to vector<2x128xf32>
    %313 = arith.mulf %312, %311 : vector<2x128xf32>
    %314 = math.tanh %313 : vector<2x128xf32>
    %cst_124 = arith.constant 5.000000e-01 : f32
    %315 = vector.broadcast %cst_124 : f32 to vector<2x128xf32>
    %316 = arith.mulf %315, %314 : vector<2x128xf32>
    %cst_125 = arith.constant 5.000000e-01 : f32
    %317 = vector.broadcast %cst_125 : f32 to vector<2x128xf32>
    %318 = arith.addf %316, %317 : vector<2x128xf32>
    %319 = vector.extract_strided_slice %302 {offsets = [0, 256], sizes = [2, 128], strides = [1, 1]} : vector<2x512xf32> to vector<2x128xf32>
    %320 = math.tanh %319 : vector<2x128xf32>
    %321 = vector.extract_strided_slice %302 {offsets = [0, 384], sizes = [2, 128], strides = [1, 1]} : vector<2x512xf32> to vector<2x128xf32>
    %cst_126 = arith.constant 5.000000e-01 : f32
    %322 = vector.broadcast %cst_126 : f32 to vector<2x128xf32>
    %323 = arith.mulf %322, %321 : vector<2x128xf32>
    %324 = math.tanh %323 : vector<2x128xf32>
    %cst_127 = arith.constant 5.000000e-01 : f32
    %325 = vector.broadcast %cst_127 : f32 to vector<2x128xf32>
    %326 = arith.mulf %325, %324 : vector<2x128xf32>
    %cst_128 = arith.constant 5.000000e-01 : f32
    %327 = vector.broadcast %cst_128 : f32 to vector<2x128xf32>
    %328 = arith.addf %326, %327 : vector<2x128xf32>
    %329 = arith.mulf %318, %291 : vector<2x128xf32>
    %330 = arith.mulf %310, %320 : vector<2x128xf32>
    %331 = arith.addf %329, %330 : vector<2x128xf32>
    %332 = math.tanh %331 : vector<2x128xf32>
    %333 = arith.mulf %328, %332 : vector<2x128xf32>
    %334 = vector.shape_cast %333 : vector<2x128xf32> to vector<2x1x128xf32>
    %c0_129 = arith.constant 0 : index
    %335 = arith.index_cast %c7_i32 : i32 to index
    %c0_130 = arith.constant 0 : index
    %336 = vector.load %arg12[%c0_129, %335, %c0_130] : memref<2x8x128xf32, #tpu.memory_space<vmem>>, vector<2x1x128xf32>
    tpu.vector_store %arg12[%c0_129, %335, %c0_130], %334 {strides = array<i32>} : memref<2x8x128xf32, #tpu.memory_space<vmem>>, vector<2x1x128xf32>,
    %c8_i32 = arith.constant 8 : i32
    %c0_131 = arith.constant 0 : index
    %c0_132 = arith.constant 0 : index
    %c0_133 = arith.constant 0 : index
    %337 = vector.load %arg9[%c0_131, %c0_132, %c0_133] : memref<1x2x128xf32, #tpu.memory_space<vmem>>, vector<1x2x128xf32>
    %338 = vector.shape_cast %337 : vector<1x2x128xf32> to vector<2x128xf32>
    %339 = vector.shape_cast %333 : vector<2x128xf32> to vector<1x2x128xf32>
    tpu.vector_store %arg9[%c0_131, %c0_132, %c0_133], %339 {strides = array<i32>} : memref<1x2x128xf32, #tpu.memory_space<vmem>>, vector<1x2x128xf32>,
    %c0_134 = arith.constant 0 : index
    %c0_135 = arith.constant 0 : index
    %c0_136 = arith.constant 0 : index
    %340 = vector.load %arg10[%c0_134, %c0_135, %c0_136] : memref<1x2x128xf32, #tpu.memory_space<vmem>>, vector<1x2x128xf32>
    %341 = vector.shape_cast %340 : vector<1x2x128xf32> to vector<2x128xf32>
    %342 = vector.shape_cast %331 : vector<2x128xf32> to vector<1x2x128xf32>
    tpu.vector_store %arg10[%c0_134, %c0_135, %c0_136], %342 {strides = array<i32>} : memref<1x2x128xf32, #tpu.memory_space<vmem>>, vector<1x2x128xf32>,
    %c0_137 = arith.constant 0 : index
    %c0_138 = arith.constant 0 : index
    %c0_139 = arith.constant 0 : index
    %343 = vector.load %arg12[%c0_137, %c0_138, %c0_139] : memref<2x8x128xf32, #tpu.memory_space<vmem>>, vector<2x8x128xf32>
    %344 = arith.truncf %343 : vector<2x8x128xf32> to vector<2x8x128xbf16>
    %345 = vector.shape_cast %344 : vector<2x8x128xbf16> to vector<16x128xbf16>
    %c0_140 = arith.constant 0 : index
    %c0_141 = arith.constant 0 : index
    %346 = vector.load %arg6[%c0_140, %c0_141] : memref<128x128xbf16, #tpu.memory_space<vmem>>, vector<128x128xbf16>
    %cst_142 = arith.constant dense<0.000000e+00> : vector<16x128xf32>
    %347 = tpu.matmul %345, %346, %cst_142 {dimension_numbers = #tpu.dot_dimension_numbers<[1], [0], [0], [1], [0, 0, 1, 1], [], []>} : vector<16x128xbf16>, vector<128x128xbf16>, vector<16x128xf32> -> vector<16x128xf32>
    %c0_143 = arith.constant 0 : index
    %c0_144 = arith.constant 0 : index
    %348 = vector.load %arg7[%c0_143, %c0_144] : memref<1x128xf32, #tpu.memory_space<vmem>>, vector<1x128xf32>
    %349 = vector.broadcast %348 : vector<1x128xf32> to vector<16x128xf32>
    %350 = arith.addf %347, %349 : vector<16x128xf32>
    %351 = vector.shape_cast %350 : vector<16x128xf32> to vector<2x8x128xf32>
    %c0_145 = arith.constant 0 : index
    %c0_146 = arith.constant 0 : index
    %c0_147 = arith.constant 0 : index
    %352 = vector.load %arg8[%c0_145, %c0_146, %c0_147] : memref<2x8x128xf32, #tpu.memory_space<vmem>>, vector<2x8x128xf32>
    tpu.vector_store %arg8[%c0_145, %c0_146, %c0_147], %351 {strides = array<i32>} : memref<2x8x128xf32, #tpu.memory_space<vmem>>, vector<2x8x128xf32>,
    return
  }
  func.func @transform_0(%arg0: i32, %arg1: i32) -> (i32, i32, i32) {
    %c0_i32 = arith.constant 0 : i32
    %c0_i32_0 = arith.constant 0 : i32
    return %arg0, %arg1, %c0_i32 : i32, i32, i32
  }
  func.func @transform_1(%arg0: i32, %arg1: i32) -> (i32, i32) {
    %c0_i32 = arith.constant 0 : i32
    %c0_i32_0 = arith.constant 0 : i32
    %c0_i32_1 = arith.constant 0 : i32
    return %c0_i32, %c0_i32_0 : i32, i32
  }
  func.func @transform_2(%arg0: i32, %arg1: i32) -> (i32, i32) {
    %c0_i32 = arith.constant 0 : i32
    %c0_i32_0 = arith.constant 0 : i32
    %c0_i32_1 = arith.constant 0 : i32
    return %c0_i32, %c0_i32_0 : i32, i32
  }
  func.func @transform_3(%arg0: i32, %arg1: i32) -> (i32, i32) {
    %c0_i32 = arith.constant 0 : i32
    %c0_i32_0 = arith.constant 0 : i32
    %c0_i32_1 = arith.constant 0 : i32
    return %c0_i32, %c0_i32_0 : i32, i32
  }
  func.func @transform_4(%arg0: i32, %arg1: i32) -> (i32, i32) {
    %c0_i32 = arith.constant 0 : i32
    %c0_i32_0 = arith.constant 0 : i32
    %c0_i32_1 = arith.constant 0 : i32
    return %c0_i32, %c0_i32_0 : i32, i32
  }
  func.func @transform_5(%arg0: i32, %arg1: i32) -> (i32, i32) {
    %c0_i32 = arith.constant 0 : i32
    %c0_i32_0 = arith.constant 0 : i32
    %c0_i32_1 = arith.constant 0 : i32
    return %c0_i32, %c0_i32_0 : i32, i32
  }
  func.func @transform_6(%arg0: i32, %arg1: i32) -> (i32, i32, i32) {
    %c0_i32 = arith.constant 0 : i32
    %c0_i32_0 = arith.constant 0 : i32
    return %arg0, %arg1, %c0_i32 : i32, i32, i32
  }
  func.func @transform_7(%arg0: i32, %arg1: i32) -> (i32, i32, i32) {
    %c0_i32 = arith.constant 0 : i32
    %c0_i32_0 = arith.constant 0 : i32
    %c0_i32_1 = arith.constant 0 : i32
    return %c0_i32, %arg0, %c0_i32_0 : i32, i32, i32
  }
  func.func @transform_8(%arg0: i32, %arg1: i32) -> (i32, i32, i32) {
    %c0_i32 = arith.constant 0 : i32
    %c0_i32_0 = arith.constant 0 : i32
    %c0_i32_1 = arith.constant 0 : i32
    return %c0_i32, %arg0, %c0_i32_0 : i32, i32, i32
  }
}

</mosaic_0001>

<llo_original>
// kernel: lstm_lm_forward.1
$region0: #{lstm_lm_forward.1}
  #allocation0 [shape = 'u32[]', space=smem, size = 0x4, offset = 0x4, fixed_abs, tag = 'smem constant byte address 0x4 - core index']
  #allocation1 [shape = 'u32[144,128]{1,0:T(1,128)}', space=vmem, size = 0x12000, scoped, tag = 'internal scratch']
  #allocation2 [shape = 'f32[2,8,512]{2,1,0:T(8,128)}', space=vmem, size = 0x8000, scoped, tag = 'scratch operand']
  #allocation3 [shape = 'f32[2,8,128]{2,1,0:T(8,128)}', space=vmem, size = 0x2000, scoped, tag = 'scratch operand']
  %s0 = inlined_call_operand.vmem [shape: bf16[2,8,16], index: 0, kind: input, shape index: {}]
  %s1 = inlined_call_operand.vmem [shape: bf16[16,512], index: 1, kind: input, shape index: {}]
  %s2 = inlined_call_operand.vmem [shape: bf16[128,512], index: 2, kind: input, shape index: {}]
  %s3 = inlined_call_operand.vmem [shape: f32[1,512], index: 3, kind: input, shape index: {}]
  %s4 = inlined_call_operand.vmem [shape: bf16[128,128], index: 4, kind: input, shape index: {}]
  %s5 = inlined_call_operand.vmem [shape: f32[1,128], index: 5, kind: input, shape index: {}]
  %s6 = inlined_call_operand.hbm [shape: f32[2,8,128], index: 6, kind: output, shape index: {0}]
  %s7 = inlined_call_operand.hbm [shape: f32[1,2,128], index: 7, kind: output, shape index: {1}]
  %s8 = inlined_call_operand.hbm [shape: f32[1,2,128], index: 8, kind: output, shape index: {2}]
  %9 = xla_tuple %s6, %s7, %s8
  %s10 = sld [smem:[#allocation0]]
  $region54: #{lstm_lm_forward.1} parent=0
    _
  %s12 = ssub.s32 1, %s10
  %s13 = scalar_select 0, %s12, %s10
  $region1: #{lstm_lm_forward.1} parent=0
    #allocation4 [shape = 'u8[8192]{0}', space=vmem, size = 0x2000, scoped, tag = 'output window, operand 0, single buffered']
    #allocation5 [shape = 's32[1]{0}', space=sflag, size = 0x4, scoped, tag = 'scoped memory for lstm_lm_forward.1']
    #allocation6 [shape = 'u8[1024]{0}', space=vmem, size = 0x400, scoped, tag = 'output window, operand 1, single buffered']
    #allocation7 [shape = 's32[1]{0}', space=sflag, size = 0x4, scoped, tag = 'scoped memory for lstm_lm_forward.1']
    #allocation8 [shape = 'u8[1024]{0}', space=vmem, size = 0x400, scoped, tag = 'output window, operand 2, single buffered']
    %14 = vsyncpa [#allocation5], 0
    %15 = vsyncpa [#allocation7], 0
    // Predicated region
    $region2: #{lstm_lm_forward.1} parent=1 // pred_check
      _
    $region3: #{lstm_lm_forward.1} parent=1 // pred_check_branch
      %17 = sbr.rel (0) target = $region5
    $region4: #{lstm_lm_forward.1} parent=1 // pred_region
      _
    $region5: #{lstm_lm_forward.1} parent=1 // pred_fallthru
      _
    // Predicated region
    $region6: #{lstm_lm_forward.1} parent=1 // pred_check
      _
    $region7: #{lstm_lm_forward.1} parent=1 // pred_check_branch
      %19 = sbr.rel (0) target = $region9
    $region8: #{lstm_lm_forward.1} parent=1 // pred_region
      _
    $region9: #{lstm_lm_forward.1} parent=1 // pred_fallthru
      _
    // Predicated region
    $region10: #{lstm_lm_forward.1} parent=1 // pred_check
      _
    $region11: #{lstm_lm_forward.1} parent=1 // pred_check_branch
      %21 = sbr.rel (0) target = $region13
    $region12: #{lstm_lm_forward.1} parent=1 // pred_region
      _
    $region13: #{lstm_lm_forward.1} parent=1 // pred_fallthru
      _
    // Predicated region
    $region14: #{lstm_lm_forward.1} parent=1 // pred_check
      _
    $region15: #{lstm_lm_forward.1} parent=1 // pred_check_branch
      %23 = sbr.rel (0) target = $region17
    $region16: #{lstm_lm_forward.1} parent=1 // pred_region
      _
    $region17: #{lstm_lm_forward.1} parent=1 // pred_fallthru
      _
    // Predicated region
    $region18: #{lstm_lm_forward.1} parent=1 // pred_check
      _
    $region19: #{lstm_lm_forward.1} parent=1 // pred_check_branch
      %25 = sbr.rel (0) target = $region21
    $region20: #{lstm_lm_forward.1} parent=1 // pred_region
      _
    $region21: #{lstm_lm_forward.1} parent=1 // pred_fallthru
      _
    // Predicated region
    $region22: #{lstm_lm_forward.1} parent=1 // pred_check
      _
    $region23: #{lstm_lm_forward.1} parent=1 // pred_check_branch
      %27 = sbr.rel (0) target = $region25
    $region24: #{lstm_lm_forward.1} parent=1 // pred_region
      _
    $region25: #{lstm_lm_forward.1} parent=1 // pred_fallthru
      _
    %p29 = scmp.eq.s32.totalorder 0, 0
    // Predicated region
    $region26: #{lstm_lm_forward.1} parent=1 // pred_check
      %p30 = pneg %p29
    $region27: #{lstm_lm_forward.1} parent=1 // pred_check_branch
      %32 = sbr.rel (%p30) target = $region29
    $region28: #{lstm_lm_forward.1} parent=1 // pred_region
      %33 = vst [vmem:[#allocation6] sm:$0x3] 0.0
      %34 = vst [vmem:[#allocation8] sm:$0x3] 0.0
    $region29: #{lstm_lm_forward.1} parent=1 // pred_fallthru
      _
    %v35 = vld [vmem:[%s0] sm:$0xf]
    %v36 = vld [vmem:[%s0 + $0x4] sm:$0xf]
    %v37 = vld [vmem:[%s1] sm:$0xff]
    %v38 = vld [vmem:[%s1 + $0x8] sm:$0xff]
    %v39 = vld [vmem:[%s1 + $0x10] sm:$0xff]
    %v40 = vld [vmem:[%s1 + $0x18] sm:$0xff]
    %v41 = vld [vmem:[%s3] sm:$0xf]
    %v43 = vlaneseq
    %v44 = vshrl.u32 %v43, 7
    %v45 = vsub.s32 0, %v44
    %v46 = vrot.slane %v41, %v45
    %v47 = vlaneseq
    %v48 = vshrl.u32 %v47, 7
    %v49 = vsub.s32 1, %v48
    %v50 = vrot.slane %v41, %v49
    %v51 = vlaneseq
    %v52 = vshrl.u32 %v51, 7
    %v53 = vsub.s32 2, %v52
    %v54 = vrot.slane %v41, %v53
    %v55 = vlaneseq
    %v56 = vshrl.u32 %v55, 7
    %v57 = vsub.s32 3, %v56
    %v58 = vrot.slane %v41, %v57
    %v65 = vunpack.c.l.b16 %v35
    %v66 = vunpack.c.l.b16 %v36
    %v67 = vpack.c.b16 %v66, %v65
    %v72 = vunpack.c.l.b16 %v37
    %v73 = vunpack.c.h.b16 %v37
    %v74 = vunpack.c.l.b16 %v38
    %v75 = vunpack.c.h.b16 %v38
    %v76 = vunpack.c.l.b16 %v39
    %v77 = vunpack.c.h.b16 %v39
    %v78 = vunpack.c.l.b16 %v40
    %v79 = vunpack.c.h.b16 %v40
    %v80 = vpack.c.b16 %v76, %v72
    %v81 = vpack.c.b16 %v77, %v73
    %v82 = vpack.c.b16 %v78, %v74
    %v83 = vpack.c.b16 %v79, %v75
    %vm88 = vcmask 130048
    %v90 = vsel %vm88, %v67, 0
    %92 = vmatprep.subr.bf16.mxu0 %v81
    %93 = vmatpush1.bf16.msra.mxu0 %v80
    %94 = vmatprep.subr.bf16.mxu0 0
    %95 = vmatpush1.bf16.msra.mxu0 0
    %96 = vmatprep.subr.bf16.mxu0 0
    %97 = vmatpush1.bf16.msra.mxu0 0
    %98 = vmatprep.subr.bf16.mxu0 0
    %99 = vmatpush1.bf16.msra.mxu0 0
    %100 = vmatprep.subr.bf16.mxu0 0
    %101 = vmatpush1.bf16.msra.mxu0 0
    %102 = vmatprep.subr.bf16.mxu0 0
    %103 = vmatpush1.bf16.msra.mxu0 0
    %104 = vmatprep.subr.bf16.mxu0 0
    %105 = vmatpush1.bf16.msra.mxu0 0
    %106 = vmatprep.subr.bf16.mxu0 0
    %107 = vmatpush1.bf16.msra.mxu0 0
    %108 = vmatprep.subr.bf16.mxu0 0
    %109 = vmatpush1.bf16.msra.mxu0 0
    %110 = vmatprep.subr.bf16.mxu0 0
    %111 = vmatpush1.bf16.msra.mxu0 0
    %112 = vmatprep.subr.bf16.mxu0 0
    %113 = vmatpush1.bf16.msra.mxu0 0
    %114 = vmatprep.subr.bf16.mxu0 0
    %115 = vmatpush1.bf16.msra.mxu0 0
    %116 = vmatprep.subr.bf16.mxu0 0
    %117 = vmatpush1.bf16.msra.mxu0 0
    %118 = vmatprep.subr.bf16.mxu0 0
    %119 = vmatpush1.bf16.msra.mxu0 0
    %120 = vmatprep.subr.bf16.mxu0 0
    %121 = vmatpush1.bf16.msra.mxu0 0
    %122 = vmatprep.subr.bf16.mxu0 0
    %123 = vmatpush1.bf16.msra.mxu0 0
    %124 = vmatprep.mubr.bf16.mxu0 0
    %125 = vmatmul.mubr.bf16.gmra.mrb[0].mxu0 %v90
    %v126 = vpop.f32.mrb[0].mxu0
    %v127 = vadd.f32 %v46, %v126
    %v128 = vpop.f32.mrb[0].mxu0
    %v129 = vadd.f32 %v50, %v128
    %v130 = vpop.f32.mrb[0].mxu0
    %v131 = vadd.f32 %v46, %v130
    %v132 = vpop.f32.mrb[0].mxu0
    %v133 = vadd.f32 %v50, %v132
    %134 = vdwg.mxu0
    %135 = vmatprep.subr.bf16.mxu0 %v83
    %136 = vmatpush1.bf16.msra.mxu0 %v82
    %137 = vmatprep.subr.bf16.mxu0 0
    %138 = vmatpush1.bf16.msra.mxu0 0
    %139 = vmatprep.subr.bf16.mxu0 0
    %140 = vmatpush1.bf16.msra.mxu0 0
    %141 = vmatprep.subr.bf16.mxu0 0
    %142 = vmatpush1.bf16.msra.mxu0 0
    %143 = vmatprep.subr.bf16.mxu0 0
    %144 = vmatpush1.bf16.msra.mxu0 0
    %145 = vmatprep.subr.bf16.mxu0 0
    %146 = vmatpush1.bf16.msra.mxu0 0
    %147 = vmatprep.subr.bf16.mxu0 0
    %148 = vmatpush1.bf16.msra.mxu0 0
    %149 = vmatprep.subr.bf16.mxu0 0
    %150 = vmatpush1.bf16.msra.mxu0 0
    %151 = vmatprep.subr.bf16.mxu0 0
    %152 = vmatpush1.bf16.msra.mxu0 0
    %153 = vmatprep.subr.bf16.mxu0 0
    %154 = vmatpush1.bf16.msra.mxu0 0
    %155 = vmatprep.subr.bf16.mxu0 0
    %156 = vmatpush1.bf16.msra.mxu0 0
    %157 = vmatprep.subr.bf16.mxu0 0
    %158 = vmatpush1.bf16.msra.mxu0 0
    %159 = vmatprep.subr.bf16.mxu0 0
    %160 = vmatpush1.bf16.msra.mxu0 0
    %161 = vmatprep.subr.bf16.mxu0 0
    %162 = vmatpush1.bf16.msra.mxu0 0
    %163 = vmatprep.subr.bf16.mxu0 0
    %164 = vmatpush1.bf16.msra.mxu0 0
    %165 = vmatprep.subr.bf16.mxu0 0
    %166 = vmatpush1.bf16.msra.mxu0 0
    %167 = vmatprep.mubr.bf16.mxu0 0
    %168 = vmatmul.mubr.bf16.gmra.mrb[0].mxu0 %v90
    %v169 = vpop.f32.mrb[0].mxu0
    %v170 = vadd.f32 %v54, %v169
    %v171 = vpop.f32.mrb[0].mxu0
    %v172 = vadd.f32 %v58, %v171
    %v173 = vpop.f32.mrb[0].mxu0
    %v174 = vadd.f32 %v54, %v173
    %v175 = vpop.f32.mrb[0].mxu0
    %v176 = vadd.f32 %v58, %v175
    %177 = vdwg.mxu0
    %178 = vst [vmem:[#allocation2] sm:$0xff] %v127
    %179 = vst [vmem:[#allocation2 + $0x8] sm:$0xff] %v129
    %180 = vst [vmem:[#allocation2 + $0x10] sm:$0xff] %v170
    %181 = vst [vmem:[#allocation2 + $0x18] sm:$0xff] %v172
    %182 = vst [vmem:[#allocation2 + $0x20] sm:$0xff] %v131
    %183 = vst [vmem:[#allocation2 + $0x28] sm:$0xff] %v133
    %184 = vst [vmem:[#allocation2 + $0x30] sm:$0xff] %v174
    %185 = vst [vmem:[#allocation2 + $0x38] sm:$0xff] %v176
    %v186 = vld [vmem:[%s2] sm:$0xff]
    %v187 = vld [vmem:[%s2 + $0x8] sm:$0xff]
    %v188 = vld [vmem:[%s2 + $0x10] sm:$0xff]
    %v189 = vld [vmem:[%s2 + $0x18] sm:$0xff]
    %v190 = vld [vmem:[%s2 + $0x20] sm:$0xff]
    %v191 = vld [vmem:[%s2 + $0x28] sm:$0xff]
    %v192 = vld [vmem:[%s2 + $0x30] sm:$0xff]
    %v193 = vld [vmem:[%s2 + $0x38] sm:$0xff]
    %v194 = vld [vmem:[%s2 + $0x40] sm:$0xff]
    %v195 = vld [vmem:[%s2 + $0x48] sm:$0xff]
    %v196 = vld [vmem:[%s2 + $0x50] sm:$0xff]
    %v197 = vld [vmem:[%s2 + $0x58] sm:$0xff]
    %v198 = vld [vmem:[%s2 + $0x60] sm:$0xff]
    %v199 = vld [vmem:[%s2 + $0x68] sm:$0xff]
    %v200 = vld [vmem:[%s2 + $0x70] sm:$0xff]
    %v201 = vld [vmem:[%s2 + $0x78] sm:$0xff]
    %v202 = vld [vmem:[%s2 + $0x80] sm:$0xff]
    %v203 = vld [vmem:[%s2 + $0x88] sm:$0xff]
    %v204 = vld [vmem:[%s2 + $0x90] sm:$0xff]
    %v205 = vld [vmem:[%s2 + $0x98] sm:$0xff]
    %v206 = vld [vmem:[%s2 + $0xa0] sm:$0xff]
    %v207 = vld [vmem:[%s2 + $0xa8] sm:$0xff]
    %v208 = vld [vmem:[%s2 + $0xb0] sm:$0xff]
    %v209 = vld [vmem:[%s2 + $0xb8] sm:$0xff]
    %v210 = vld [vmem:[%s2 + $0xc0] sm:$0xff]
    %v211 = vld [vmem:[%s2 + $0xc8] sm:$0xff]
    %v212 = vld [vmem:[%s2 + $0xd0] sm:$0xff]
    %v213 = vld [vmem:[%s2 + $0xd8] sm:$0xff]
    %v214 = vld [vmem:[%s2 + $0xe0] sm:$0xff]
    %v215 = vld [vmem:[%s2 + $0xe8] sm:$0xff]
    %v216 = vld [vmem:[%s2 + $0xf0] sm:$0xff]
    %v217 = vld [vmem:[%s2 + $0xf8] sm:$0xff]
    %v218 = vld [vmem:[#allocation6] sm:$0x3]
    %v219 = vld [vmem:[#allocation8] sm:$0x3]
    %v220 = vld [vmem:[#allocation2] ss:$8 sm:$0xf]
    %s221 = scalar_lea.vmem [#allocation2], 32
    %v222 = vld [vmem:[%s221] ss:$8 sm:$0xf]
    %v223 = vpack.c.bf16 %v218, %v218
    %v256 = vunpack.c.l.b16 %v186
    %v257 = vunpack.c.h.b16 %v186
    %v258 = vunpack.c.l.b16 %v187
    %v259 = vunpack.c.h.b16 %v187
    %v260 = vunpack.c.l.b16 %v188
    %v261 = vunpack.c.h.b16 %v188
    %v262 = vunpack.c.l.b16 %v189
    %v263 = vunpack.c.h.b16 %v189
    %v264 = vunpack.c.l.b16 %v190
    %v265 = vunpack.c.h.b16 %v190
    %v266 = vunpack.c.l.b16 %v191
    %v267 = vunpack.c.h.b16 %v191
    %v268 = vunpack.c.l.b16 %v192
    %v269 = vunpack.c.h.b16 %v192
    %v270 = vunpack.c.l.b16 %v193
    %v271 = vunpack.c.h.b16 %v193
    %v272 = vunpack.c.l.b16 %v194
    %v273 = vunpack.c.h.b16 %v194
    %v274 = vunpack.c.l.b16 %v195
    %v275 = vunpack.c.h.b16 %v195
    %v276 = vunpack.c.l.b16 %v196
    %v277 = vunpack.c.h.b16 %v196
    %v278 = vunpack.c.l.b16 %v197
    %v279 = vunpack.c.h.b16 %v197
    %v280 = vunpack.c.l.b16 %v198
    %v281 = vunpack.c.h.b16 %v198
    %v282 = vunpack.c.l.b16 %v199
    %v283 = vunpack.c.h.b16 %v199
    %v284 = vunpack.c.l.b16 %v200
    %v285 = vunpack.c.h.b16 %v200
    %v286 = vunpack.c.l.b16 %v201
    %v287 = vunpack.c.h.b16 %v201
    %v288 = vunpack.c.l.b16 %v202
    %v289 = vunpack.c.h.b16 %v202
    %v290 = vunpack.c.l.b16 %v203
    %v291 = vunpack.c.h.b16 %v203
    %v292 = vunpack.c.l.b16 %v204
    %v293 = vunpack.c.h.b16 %v204
    %v294 = vunpack.c.l.b16 %v205
    %v295 = vunpack.c.h.b16 %v205
    %v296 = vunpack.c.l.b16 %v206
    %v297 = vunpack.c.h.b16 %v206
    %v298 = vunpack.c.l.b16 %v207
    %v299 = vunpack.c.h.b16 %v207
    %v300 = vunpack.c.l.b16 %v208
    %v301 = vunpack.c.h.b16 %v208
    %v302 = vunpack.c.l.b16 %v209
    %v303 = vunpack.c.h.b16 %v209
    %v304 = vunpack.c.l.b16 %v210
    %v305 = vunpack.c.h.b16 %v210
    %v306 = vunpack.c.l.b16 %v211
    %v307 = vunpack.c.h.b16 %v211
    %v308 = vunpack.c.l.b16 %v212
    %v309 = vunpack.c.h.b16 %v212
    %v310 = vunpack.c.l.b16 %v213
    %v311 = vunpack.c.h.b16 %v213
    %v312 = vunpack.c.l.b16 %v214
    %v313 = vunpack.c.h.b16 %v214
    %v314 = vunpack.c.l.b16 %v215
    %v315 = vunpack.c.h.b16 %v215
    %v316 = vunpack.c.l.b16 %v216
    %v317 = vunpack.c.h.b16 %v216
    %v318 = vunpack.c.l.b16 %v217
    %v319 = vunpack.c.h.b16 %v217
    %v320 = vpack.c.b16 %v260, %v256
    %v321 = vpack.c.b16 %v261, %v257
    %v322 = vpack.c.b16 %v262, %v258
    %v323 = vpack.c.b16 %v263, %v259
    %v324 = vpack.c.b16 %v268, %v264
    %v325 = vpack.c.b16 %v269, %v265
    %v326 = vpack.c.b16 %v270, %v266
    %v327 = vpack.c.b16 %v271, %v267
    %v328 = vpack.c.b16 %v276, %v272
    %v329 = vpack.c.b16 %v277, %v273
    %v330 = vpack.c.b16 %v278, %v274
    %v331 = vpack.c.b16 %v279, %v275
    %v332 = vpack.c.b16 %v284, %v280
    %v333 = vpack.c.b16 %v285, %v281
    %v334 = vpack.c.b16 %v286, %v282
    %v335 = vpack.c.b16 %v287, %v283
    %v336 = vpack.c.b16 %v292, %v288
    %v337 = vpack.c.b16 %v293, %v289
    %v338 = vpack.c.b16 %v294, %v290
    %v339 = vpack.c.b16 %v295, %v291
    %v340 = vpack.c.b16 %v300, %v296
    %v341 = vpack.c.b16 %v301, %v297
    %v342 = vpack.c.b16 %v302, %v298
    %v343 = vpack.c.b16 %v303, %v299
    %v344 = vpack.c.b16 %v308, %v304
    %v345 = vpack.c.b16 %v309, %v305
    %v346 = vpack.c.b16 %v310, %v306
    %v347 = vpack.c.b16 %v311, %v307
    %v348 = vpack.c.b16 %v316, %v312
    %v349 = vpack.c.b16 %v317, %v313
    %v350 = vpack.c.b16 %v318, %v314
    %v351 = vpack.c.b16 %v319, %v315
    %384 = vmatprep.subr.bf16.mxu0 %v321
    %385 = vmatpush1.bf16.msra.mxu0 %v320
    %386 = vmatprep.subr.bf16.mxu0 %v325
    %387 = vmatpush1.bf16.msra.mxu0 %v324
    %388 = vmatprep.subr.bf16.mxu0 %v329
    %389 = vmatpush1.bf16.msra.mxu0 %v328
    %390 = vmatprep.subr.bf16.mxu0 %v333
    %391 = vmatpush1.bf16.msra.mxu0 %v332
    %392 = vmatprep.subr.bf16.mxu0 %v337
    %393 = vmatpush1.bf16.msra.mxu0 %v336
    %394 = vmatprep.subr.bf16.mxu0 %v341
    %395 = vmatpush1.bf16.msra.mxu0 %v340
    %396 = vmatprep.subr.bf16.mxu0 %v345
    %397 = vmatpush1.bf16.msra.mxu0 %v344
    %398 = vmatprep.subr.bf16.mxu0 %v349
    %399 = vmatpush1.bf16.msra.mxu0 %v348
    %400 = vmatprep.subr.bf16.mxu0 0
    %401 = vmatpush1.bf16.msra.mxu0 0
    %402 = vmatprep.subr.bf16.mxu0 0
    %403 = vmatpush1.bf16.msra.mxu0 0
    %404 = vmatprep.subr.bf16.mxu0 0
    %405 = vmatpush1.bf16.msra.mxu0 0
    %406 = vmatprep.subr.bf16.mxu0 0
    %407 = vmatpush1.bf16.msra.mxu0 0
    %408 = vmatprep.subr.bf16.mxu0 0
    %409 = vmatpush1.bf16.msra.mxu0 0
    %410 = vmatprep.subr.bf16.mxu0 0
    %411 = vmatpush1.bf16.msra.mxu0 0
    %412 = vmatprep.subr.bf16.mxu0 0
    %413 = vmatpush1.bf16.msra.mxu0 0
    %414 = vmatprep.subr.bf16.mxu0 0
    %415 = vmatpush1.bf16.msra.mxu0 0
    %416 = vmatprep.mubr.bf16.mxu0 0
    %417 = vmatmul.mubr.bf16.gmra.mrb[0].mxu0 %v223
    %v418 = vpop.f32.mrb[0].mxu0
    %v419 = vadd.f32 0.0, %v418
    %v420 = vpop.f32.mrb[0].mxu0
    %v421 = vadd.f32 0.0, %v420
    %v422 = vpop.f32.mrb[0].mxu0
    %v423 = vpop.f32.mrb[0].mxu0
    %424 = vdwg.mxu0
    %425 = vmatprep.subr.bf16.mxu0 %v323
    %426 = vmatpush1.bf16.msra.mxu0 %v322
    %427 = vmatprep.subr.bf16.mxu0 %v327
    %428 = vmatpush1.bf16.msra.mxu0 %v326
    %429 = vmatprep.subr.bf16.mxu0 %v331
    %430 = vmatpush1.bf16.msra.mxu0 %v330
    %431 = vmatprep.subr.bf16.mxu0 %v335
    %432 = vmatpush1.bf16.msra.mxu0 %v334
    %433 = vmatprep.subr.bf16.mxu0 %v339
    %434 = vmatpush1.bf16.msra.mxu0 %v338
    %435 = vmatprep.subr.bf16.mxu0 %v343
    %436 = vmatpush1.bf16.msra.mxu0 %v342
    %437 = vmatprep.subr.bf16.mxu0 %v347
    %438 = vmatpush1.bf16.msra.mxu0 %v346
    %439 = vmatprep.subr.bf16.mxu0 %v351
    %440 = vmatpush1.bf16.msra.mxu0 %v350
    %441 = vmatprep.subr.bf16.mxu0 0
    %442 = vmatpush1.bf16.msra.mxu0 0
    %443 = vmatprep.subr.bf16.mxu0 0
    %444 = vmatpush1.bf16.msra.mxu0 0
    %445 = vmatprep.subr.bf16.mxu0 0
    %446 = vmatpush1.bf16.msra.mxu0 0
    %447 = vmatprep.subr.bf16.mxu0 0
    %448 = vmatpush1.bf16.msra.mxu0 0
    %449 = vmatprep.subr.bf16.mxu0 0
    %450 = vmatpush1.bf16.msra.mxu0 0
    %451 = vmatprep.subr.bf16.mxu0 0
    %452 = vmatpush1.bf16.msra.mxu0 0
    %453 = vmatprep.subr.bf16.mxu0 0
    %454 = vmatpush1.bf16.msra.mxu0 0
    %455 = vmatprep.subr.bf16.mxu0 0
    %456 = vmatpush1.bf16.msra.mxu0 0
    %457 = vmatprep.mubr.bf16.mxu0 0
    %458 = vmatmul.mubr.bf16.gmra.mrb[0].mxu0 %v223
    %v459 = vpop.f32.mrb[0].mxu0
    %v460 = vadd.f32 0.0, %v459
    %v461 = vpop.f32.mrb[0].mxu0
    %v462 = vadd.f32 0.0, %v461
    %v463 = vpop.f32.mrb[0].mxu0
    %v464 = vpop.f32.mrb[0].mxu0
    %465 = vdwg.mxu0
    %v470 = vcombine.low %v419, %v421
    %v471 = vcombine.low %v460, %v462
    %v473 = vunpack.c.l.s4 1966171168
    %v474 = vunpack.c.0.s8 %v473
    %v475 = vlaneseq
    %v476 = vshrl.u32 %v475, 7
    %v477 = vsub.s32 %v474, %v476
    %v478 = vrot.slane %v470, %v477
    %v480 = vunpack.c.l.s4 1966171168
    %v481 = vunpack.c.0.s8 %v480
    %v482 = vlaneseq
    %v483 = vshrl.u32 %v482, 7
    %v484 = vsub.s32 %v481, %v483
    %v485 = vrot.slane %v471, %v484
    %v486 = vcombine.low %v478, %v485
    %v487 = vcombine.high %v478, %v485
    %v489 = vunpack.c.l.s4 1966171168
    %v490 = vunpack.c.0.s8 %v489
    %v491 = vlaneseq
    %v492 = vshrl.u32 %v491, 7
    %v493 = vsub.s32 %v490, %v492
    %v494 = vrot.slane %v486, %v493
    %v496 = vunpack.c.l.s4 1966171168
    %v497 = vunpack.c.0.s8 %v496
    %v498 = vlaneseq
    %v499 = vshrl.u32 %v498, 7
    %v500 = vsub.s32 %v497, %v499
    %v501 = vrot.slane %v487, %v500
    %v504 = vadd.f32 %v220, %v494
    %v505 = vadd.f32 %v222, %v501
    %v506 = vmul.f32 %v504, 0.5
    %v507 = vmul.f32 %v505, 0.5
    %v508 = vtanh.pop %v506
    %v509 = vtanh.pop %v507
    %v510 = vmul.f32 %v508, 0.5
    %v511 = vmul.f32 %v509, 0.5
    %v512 = vadd.f32 %v510, 0.5
    %v513 = vadd.f32 %v511, 0.5
    %v516 = vrot.slane %v504, 1
    %v517 = vrot.slane %v505, 1
    %v520 = vmul.f32 %v516, 0.5
    %v521 = vmul.f32 %v517, 0.5
    %v522 = vtanh.pop %v520
    %v523 = vtanh.pop %v521
    %v524 = vmul.f32 %v522, 0.5
    %v525 = vmul.f32 %v523, 0.5
    %v526 = vadd.f32 %v524, 0.5
    %v527 = vadd.f32 %v525, 0.5
    %v528 = vrot.slane %v504, 2
    %v529 = vrot.slane %v505, 2
    %v532 = vtanh.pop %v528
    %v533 = vtanh.pop %v529
    %v534 = vrot.slane %v504, 3
    %v535 = vrot.slane %v505, 3
    %v538 = vmul.f32 %v534, 0.5
    %v539 = vmul.f32 %v535, 0.5
    %v540 = vtanh.pop %v538
    %v541 = vtanh.pop %v539
    %v542 = vmul.f32 %v540, 0.5
    %v543 = vmul.f32 %v541, 0.5
    %v544 = vadd.f32 %v542, 0.5
    %v545 = vadd.f32 %v543, 0.5
    %v548 = vunpack.c.l.s4 1966171168
    %v549 = vunpack.c.0.s8 %v548
    %v550 = vlaneseq
    %v551 = vshrl.u32 %v550, 7
    %v552 = vsub.s32 %v549, %v551
    %v553 = vrot.slane %v219, %v552
    %v554 = vcombine.high %v553, %v553
    %v556 = vunpack.c.l.s4 1966171168
    %v557 = vunpack.c.0.s8 %v556
    %v558 = vlaneseq
    %v559 = vshrl.u32 %v558, 7
    %v560 = vsub.s32 %v557, %v559
    %v561 = vrot.slane %v553, %v560
    %v563 = vunpack.c.l.s4 1966171168
    %v564 = vunpack.c.0.s8 %v563
    %v565 = vlaneseq
    %v566 = vshrl.u32 %v565, 7
    %v567 = vsub.s32 %v564, %v566
    %v568 = vrot.slane %v554, %v567
    %v571 = vmul.f32 %v526, %v561
    %v572 = vmul.f32 %v527, %v568
    %v573 = vmul.f32 %v512, %v532
    %v574 = vmul.f32 %v513, %v533
    %v575 = vadd.f32 %v571, %v573
    %v576 = vadd.f32 %v572, %v574
    %v577 = vtanh.pop %v575
    %v578 = vtanh.pop %v576
    %v579 = vmul.f32 %v544, %v577
    %v580 = vmul.f32 %v545, %v578
    %581 = vst [vmem:[#allocation3] sm:$0x1] %v579
    %582 = vst [vmem:[#allocation3 + $0x8] sm:$0x1] %v580
    %s583 = scalar_lea.vmem [#allocation2], 1
    %v584 = vld [vmem:[%s583] ss:$8 sm:$0xf]
    %s585 = scalar_lea.vmem [#allocation2], 33
    %v586 = vld [vmem:[%s585] ss:$8 sm:$0xf]
    %v587 = vpack.c.bf16 %v579, %v579
    %v588 = vpack.c.bf16 %v580, %v580
    %v591 = vunpack.c.l.b16 %v587
    %v592 = vunpack.c.l.b16 %v588
    %v593 = vrot.slane %v592, 7
    %vm594 = vcmask 1041409
    %v595 = vsel %vm594, %v593, %v591
    %v596 = vpack.c.b16 %v595, %v595
    %598 = vmatprep.subr.bf16.mxu0 %v321
    %599 = vmatpush1.bf16.msra.mxu0 %v320
    %600 = vmatprep.subr.bf16.mxu0 %v325
    %601 = vmatpush1.bf16.msra.mxu0 %v324
    %602 = vmatprep.subr.bf16.mxu0 %v329
    %603 = vmatpush1.bf16.msra.mxu0 %v328
    %604 = vmatprep.subr.bf16.mxu0 %v333
    %605 = vmatpush1.bf16.msra.mxu0 %v332
    %606 = vmatprep.subr.bf16.mxu0 %v337
    %607 = vmatpush1.bf16.msra.mxu0 %v336
    %608 = vmatprep.subr.bf16.mxu0 %v341
    %609 = vmatpush1.bf16.msra.mxu0 %v340
    %610 = vmatprep.subr.bf16.mxu0 %v345
    %611 = vmatpush1.bf16.msra.mxu0 %v344
    %612 = vmatprep.subr.bf16.mxu0 %v349
    %613 = vmatpush1.bf16.msra.mxu0 %v348
    %614 = vmatprep.subr.bf16.mxu0 0
    %615 = vmatpush1.bf16.msra.mxu0 0
    %616 = vmatprep.subr.bf16.mxu0 0
    %617 = vmatpush1.bf16.msra.mxu0 0
    %618 = vmatprep.subr.bf16.mxu0 0
    %619 = vmatpush1.bf16.msra.mxu0 0
    %620 = vmatprep.subr.bf16.mxu0 0
    %621 = vmatpush1.bf16.msra.mxu0 0
    %622 = vmatprep.subr.bf16.mxu0 0
    %623 = vmatpush1.bf16.msra.mxu0 0
    %624 = vmatprep.subr.bf16.mxu0 0
    %625 = vmatpush1.bf16.msra.mxu0 0
    %626 = vmatprep.subr.bf16.mxu0 0
    %627 = vmatpush1.bf16.msra.mxu0 0
    %628 = vmatprep.subr.bf16.mxu0 0
    %629 = vmatpush1.bf16.msra.mxu0 0
    %630 = vmatprep.mubr.bf16.mxu0 0
    %631 = vmatmul.mubr.bf16.gmra.mrb[0].mxu0 %v596
    %v632 = vpop.f32.mrb[0].mxu0
    %v633 = vadd.f32 0.0, %v632
    %v634 = vpop.f32.mrb[0].mxu0
    %v635 = vadd.f32 0.0, %v634
    %v636 = vpop.f32.mrb[0].mxu0
    %v637 = vpop.f32.mrb[0].mxu0
    %638 = vdwg.mxu0
    %639 = vmatprep.subr.bf16.mxu0 %v323
    %640 = vmatpush1.bf16.msra.mxu0 %v322
    %641 = vmatprep.subr.bf16.mxu0 %v327
    %642 = vmatpush1.bf16.msra.mxu0 %v326
    %643 = vmatprep.subr.bf16.mxu0 %v331
    %644 = vmatpush1.bf16.msra.mxu0 %v330
    %645 = vmatprep.subr.bf16.mxu0 %v335
    %646 = vmatpush1.bf16.msra.mxu0 %v334
    %647 = vmatprep.subr.bf16.mxu0 %v339
    %648 = vmatpush1.bf16.msra.mxu0 %v338
    %649 = vmatprep.subr.bf16.mxu0 %v343
    %650 = vmatpush1.bf16.msra.mxu0 %v342
    %651 = vmatprep.subr.bf16.mxu0 %v347
    %652 = vmatpush1.bf16.msra.mxu0 %v346
    %653 = vmatprep.subr.bf16.mxu0 %v351
    %654 = vmatpush1.bf16.msra.mxu0 %v350
    %655 = vmatprep.subr.bf16.mxu0 0
    %656 = vmatpush1.bf16.msra.mxu0 0
    %657 = vmatprep.subr.bf16.mxu0 0
    %658 = vmatpush1.bf16.msra.mxu0 0
    %659 = vmatprep.subr.bf16.mxu0 0
    %660 = vmatpush1.bf16.msra.mxu0 0
    %661 = vmatprep.subr.bf16.mxu0 0
    %662 = vmatpush1.bf16.msra.mxu0 0
    %663 = vmatprep.subr.bf16.mxu0 0
    %664 = vmatpush1.bf16.msra.mxu0 0
    %665 = vmatprep.subr.bf16.mxu0 0
    %666 = vmatpush1.bf16.msra.mxu0 0
    %667 = vmatprep.subr.bf16.mxu0 0
    %668 = vmatpush1.bf16.msra.mxu0 0
    %669 = vmatprep.subr.bf16.mxu0 0
    %670 = vmatpush1.bf16.msra.mxu0 0
    %671 = vmatprep.mubr.bf16.mxu0 0
    %672 = vmatmul.mubr.bf16.gmra.mrb[0].mxu0 %v596
    %v673 = vpop.f32.mrb[0].mxu0
    %v674 = vadd.f32 0.0, %v673
    %v675 = vpop.f32.mrb[0].mxu0
    %v676 = vadd.f32 0.0, %v675
    %v677 = vpop.f32.mrb[0].mxu0
    %v678 = vpop.f32.mrb[0].mxu0
    %679 = vdwg.mxu0
    %v684 = vcombine.low %v633, %v635
    %v685 = vcombine.low %v674, %v676
    %v687 = vunpack.c.l.s4 1966171168
    %v688 = vunpack.c.0.s8 %v687
    %v689 = vlaneseq
    %v690 = vshrl.u32 %v689, 7
    %v691 = vsub.s32 %v688, %v690
    %v692 = vrot.slane %v684, %v691
    %v694 = vunpack.c.l.s4 1966171168
    %v695 = vunpack.c.0.s8 %v694
    %v696 = vlaneseq
    %v697 = vshrl.u32 %v696, 7
    %v698 = vsub.s32 %v695, %v697
    %v699 = vrot.slane %v685, %v698
    %v700 = vcombine.low %v692, %v699
    %v701 = vcombine.high %v692, %v699
    %v703 = vunpack.c.l.s4 1966171168
    %v704 = vunpack.c.0.s8 %v703
    %v705 = vlaneseq
    %v706 = vshrl.u32 %v705, 7
    %v707 = vsub.s32 %v704, %v706
    %v708 = vrot.slane %v700, %v707
    %v710 = vunpack.c.l.s4 1966171168
    %v711 = vunpack.c.0.s8 %v710
    %v712 = vlaneseq
    %v713 = vshrl.u32 %v712, 7
    %v714 = vsub.s32 %v711, %v713
    %v715 = vrot.slane %v701, %v714
    %v718 = vadd.f32 %v584, %v708
    %v719 = vadd.f32 %v586, %v715
    %v720 = vmul.f32 %v718, 0.5
    %v721 = vmul.f32 %v719, 0.5
    %v722 = vtanh.pop %v720
    %v723 = vtanh.pop %v721
    %v724 = vmul.f32 %v722, 0.5
    %v725 = vmul.f32 %v723, 0.5
    %v726 = vadd.f32 %v724, 0.5
    %v727 = vadd.f32 %v725, 0.5
    %v730 = vrot.slane %v718, 1
    %v731 = vrot.slane %v719, 1
    %v734 = vmul.f32 %v730, 0.5
    %v735 = vmul.f32 %v731, 0.5
    %v736 = vtanh.pop %v734
    %v737 = vtanh.pop %v735
    %v738 = vmul.f32 %v736, 0.5
    %v739 = vmul.f32 %v737, 0.5
    %v740 = vadd.f32 %v738, 0.5
    %v741 = vadd.f32 %v739, 0.5
    %v742 = vrot.slane %v718, 2
    %v743 = vrot.slane %v719, 2
    %v746 = vtanh.pop %v742
    %v747 = vtanh.pop %v743
    %v748 = vrot.slane %v718, 3
    %v749 = vrot.slane %v719, 3
    %v752 = vmul.f32 %v748, 0.5
    %v753 = vmul.f32 %v749, 0.5
    %v754 = vtanh.pop %v752
    %v755 = vtanh.pop %v753
    %v756 = vmul.f32 %v754, 0.5
    %v757 = vmul.f32 %v755, 0.5
    %v758 = vadd.f32 %v756, 0.5
    %v759 = vadd.f32 %v757, 0.5
    %v760 = vmul.f32 %v740, %v575
    %v761 = vmul.f32 %v741, %v576
    %v762 = vmul.f32 %v726, %v746
    %v763 = vmul.f32 %v727, %v747
    %v764 = vadd.f32 %v760, %v762
    %v765 = vadd.f32 %v761, %v763
    %v766 = vtanh.pop %v764
    %v767 = vtanh.pop %v765
    %v768 = vmul.f32 %v758, %v766
    %v769 = vmul.f32 %v759, %v767
    %770 = vst [vmem:[#allocation3 + $0x1] sm:$0x1] %v768
    %771 = vst [vmem:[#allocation3 + $0x9] sm:$0x1] %v769
    %s772 = scalar_lea.vmem [#allocation2], 2
    %v773 = vld [vmem:[%s772] ss:$8 sm:$0xf]
    %s774 = scalar_lea.vmem [#allocation2], 34
    %v775 = vld [vmem:[%s774] ss:$8 sm:$0xf]
    %v776 = vpack.c.bf16 %v768, %v768
    %v777 = vpack.c.bf16 %v769, %v769
    %v780 = vunpack.c.l.b16 %v776
    %v781 = vunpack.c.l.b16 %v777
    %v782 = vrot.slane %v781, 7
    %v783 = vsel %vm594, %v782, %v780
    %v784 = vpack.c.b16 %v783, %v783
    %786 = vmatprep.subr.bf16.mxu0 %v321
    %787 = vmatpush1.bf16.msra.mxu0 %v320
    %788 = vmatprep.subr.bf16.mxu0 %v325
    %789 = vmatpush1.bf16.msra.mxu0 %v324
    %790 = vmatprep.subr.bf16.mxu0 %v329
    %791 = vmatpush1.bf16.msra.mxu0 %v328
    %792 = vmatprep.subr.bf16.mxu0 %v333
    %793 = vmatpush1.bf16.msra.mxu0 %v332
    %794 = vmatprep.subr.bf16.mxu0 %v337
    %795 = vmatpush1.bf16.msra.mxu0 %v336
    %796 = vmatprep.subr.bf16.mxu0 %v341
    %797 = vmatpush1.bf16.msra.mxu0 %v340
    %798 = vmatprep.subr.bf16.mxu0 %v345
    %799 = vmatpush1.bf16.msra.mxu0 %v344
    %800 = vmatprep.subr.bf16.mxu0 %v349
    %801 = vmatpush1.bf16.msra.mxu0 %v348
    %802 = vmatprep.subr.bf16.mxu0 0
    %803 = vmatpush1.bf16.msra.mxu0 0
    %804 = vmatprep.subr.bf16.mxu0 0
    %805 = vmatpush1.bf16.msra.mxu0 0
    %806 = vmatprep.subr.bf16.mxu0 0
    %807 = vmatpush1.bf16.msra.mxu0 0
    %808 = vmatprep.subr.bf16.mxu0 0
    %809 = vmatpush1.bf16.msra.mxu0 0
    %810 = vmatprep.subr.bf16.mxu0 0
    %811 = vmatpush1.bf16.msra.mxu0 0
    %812 = vmatprep.subr.bf16.mxu0 0
    %813 = vmatpush1.bf16.msra.mxu0 0
    %814 = vmatprep.subr.bf16.mxu0 0
    %815 = vmatpush1.bf16.msra.mxu0 0
    %816 = vmatprep.subr.bf16.mxu0 0
    %817 = vmatpush1.bf16.msra.mxu0 0
    %818 = vmatprep.mubr.bf16.mxu0 0
    %819 = vmatmul.mubr.bf16.gmra.mrb[0].mxu0 %v784
    %v820 = vpop.f32.mrb[0].mxu0
    %v821 = vadd.f32 0.0, %v820
    %v822 = vpop.f32.mrb[0].mxu0
    %v823 = vadd.f32 0.0, %v822
    %v824 = vpop.f32.mrb[0].mxu0
    %v825 = vpop.f32.mrb[0].mxu0
    %826 = vdwg.mxu0
    %827 = vmatprep.subr.bf16.mxu0 %v323
    %828 = vmatpush1.bf16.msra.mxu0 %v322
    %829 = vmatprep.subr.bf16.mxu0 %v327
    %830 = vmatpush1.bf16.msra.mxu0 %v326
    %831 = vmatprep.subr.bf16.mxu0 %v331
    %832 = vmatpush1.bf16.msra.mxu0 %v330
    %833 = vmatprep.subr.bf16.mxu0 %v335
    %834 = vmatpush1.bf16.msra.mxu0 %v334
    %835 = vmatprep.subr.bf16.mxu0 %v339
    %836 = vmatpush1.bf16.msra.mxu0 %v338
    %837 = vmatprep.subr.bf16.mxu0 %v343
    %838 = vmatpush1.bf16.msra.mxu0 %v342
    %839 = vmatprep.subr.bf16.mxu0 %v347
    %840 = vmatpush1.bf16.msra.mxu0 %v346
    %841 = vmatprep.subr.bf16.mxu0 %v351
    %842 = vmatpush1.bf16.msra.mxu0 %v350
    %843 = vmatprep.subr.bf16.mxu0 0
    %844 = vmatpush1.bf16.msra.mxu0 0
    %845 = vmatprep.subr.bf16.mxu0 0
    %846 = vmatpush1.bf16.msra.mxu0 0
    %847 = vmatprep.subr.bf16.mxu0 0
    %848 = vmatpush1.bf16.msra.mxu0 0
    %849 = vmatprep.subr.bf16.mxu0 0
    %850 = vmatpush1.bf16.msra.mxu0 0
    %851 = vmatprep.subr.bf16.mxu0 0
    %852 = vmatpush1.bf16.msra.mxu0 0
    %853 = vmatprep.subr.bf16.mxu0 0
    %854 = vmatpush1.bf16.msra.mxu0 0
    %855 = vmatprep.subr.bf16.mxu0 0
    %856 = vmatpush1.bf16.msra.mxu0 0
    %857 = vmatprep.subr.bf16.mxu0 0
    %858 = vmatpush1.bf16.msra.mxu0 0
    %859 = vmatprep.mubr.bf16.mxu0 0
    %860 = vmatmul.mubr.bf16.gmra.mrb[0].mxu0 %v784
    %v861 = vpop.f32.mrb[0].mxu0
    %v862 = vadd.f32 0.0, %v861
    %v863 = vpop.f32.mrb[0].mxu0
    %v864 = vadd.f32 0.0, %v863
    %v865 = vpop.f32.mrb[0].mxu0
    %v866 = vpop.f32.mrb[0].mxu0
    %867 = vdwg.mxu0
    %v872 = vcombine.low %v821, %v823
    %v873 = vcombine.low %v862, %v864
    %v875 = vunpack.c.l.s4 1966171168
    %v876 = vunpack.c.0.s8 %v875
    %v877 = vlaneseq
    %v878 = vshrl.u32 %v877, 7
    %v879 = vsub.s32 %v876, %v878
    %v880 = vrot.slane %v872, %v879
    %v882 = vunpack.c.l.s4 1966171168
    %v883 = vunpack.c.0.s8 %v882
    %v884 = vlaneseq
    %v885 = vshrl.u32 %v884, 7
    %v886 = vsub.s32 %v883, %v885
    %v887 = vrot.slane %v873, %v886
    %v888 = vcombine.low %v880, %v887
    %v889 = vcombine.high %v880, %v887
    %v891 = vunpack.c.l.s4 1966171168
    %v892 = vunpack.c.0.s8 %v891
    %v893 = vlaneseq
    %v894 = vshrl.u32 %v893, 7
    %v895 = vsub.s32 %v892, %v894
    %v896 = vrot.slane %v888, %v895
    %v898 = vunpack.c.l.s4 1966171168
    %v899 = vunpack.c.0.s8 %v898
    %v900 = vlaneseq
    %v901 = vshrl.u32 %v900, 7
    %v902 = vsub.s32 %v899, %v901
    %v903 = vrot.slane %v889, %v902
    %v906 = vadd.f32 %v773, %v896
    %v907 = vadd.f32 %v775, %v903
    %v908 = vmul.f32 %v906, 0.5
    %v909 = vmul.f32 %v907, 0.5
    %v910 = vtanh.pop %v908
    %v911 = vtanh.pop %v909
    %v912 = vmul.f32 %v910, 0.5
    %v913 = vmul.f32 %v911, 0.5
    %v914 = vadd.f32 %v912, 0.5
    %v915 = vadd.f32 %v913, 0.5
    %v918 = vrot.slane %v906, 1
    %v919 = vrot.slane %v907, 1
    %v922 = vmul.f32 %v918, 0.5
    %v923 = vmul.f32 %v919, 0.5
    %v924 = vtanh.pop %v922
    %v925 = vtanh.pop %v923
    %v926 = vmul.f32 %v924, 0.5
    %v927 = vmul.f32 %v925, 0.5
    %v928 = vadd.f32 %v926, 0.5
    %v929 = vadd.f32 %v927, 0.5
    %v930 = vrot.slane %v906, 2
    %v931 = vrot.slane %v907, 2
    %v934 = vtanh.pop %v930
    %v935 = vtanh.pop %v931
    %v936 = vrot.slane %v906, 3
    %v937 = vrot.slane %v907, 3
    %v940 = vmul.f32 %v936, 0.5
    %v941 = vmul.f32 %v937, 0.5
    %v942 = vtanh.pop %v940
    %v943 = vtanh.pop %v941
    %v944 = vmul.f32 %v942, 0.5
    %v945 = vmul.f32 %v943, 0.5
    %v946 = vadd.f32 %v944, 0.5
    %v947 = vadd.f32 %v945, 0.5
    %v948 = vmul.f32 %v928, %v764
    %v949 = vmul.f32 %v929, %v765
    %v950 = vmul.f32 %v914, %v934
    %v951 = vmul.f32 %v915, %v935
    %v952 = vadd.f32 %v948, %v950
    %v953 = vadd.f32 %v949, %v951
    %v954 = vtanh.pop %v952
    %v955 = vtanh.pop %v953
    %v956 = vmul.f32 %v946, %v954
    %v957 = vmul.f32 %v947, %v955
    %958 = vst [vmem:[#allocation3 + $0x2] sm:$0x1] %v956
    %959 = vst [vmem:[#allocation3 + $0xa] sm:$0x1] %v957
    %s960 = scalar_lea.vmem [#allocation2], 3
    %v961 = vld [vmem:[%s960] ss:$8 sm:$0xf]
    %s962 = scalar_lea.vmem [#allocation2], 35
    %v963 = vld [vmem:[%s962] ss:$8 sm:$0xf]
    %v964 = vpack.c.bf16 %v956, %v956
    %v965 = vpack.c.bf16 %v957, %v957
    %v968 = vunpack.c.l.b16 %v964
    %v969 = vunpack.c.l.b16 %v965
    %v970 = vrot.slane %v969, 7
    %v971 = vsel %vm594, %v970, %v968
    %v972 = vpack.c.b16 %v971, %v971
    %974 = vmatprep.subr.bf16.mxu0 %v321
    %975 = vmatpush1.bf16.msra.mxu0 %v320
    %976 = vmatprep.subr.bf16.mxu0 %v325
    %977 = vmatpush1.bf16.msra.mxu0 %v324
    %978 = vmatprep.subr.bf16.mxu0 %v329
    %979 = vmatpush1.bf16.msra.mxu0 %v328
    %980 = vmatprep.subr.bf16.mxu0 %v333
    %981 = vmatpush1.bf16.msra.mxu0 %v332
    %982 = vmatprep.subr.bf16.mxu0 %v337
    %983 = vmatpush1.bf16.msra.mxu0 %v336
    %984 = vmatprep.subr.bf16.mxu0 %v341
    %985 = vmatpush1.bf16.msra.mxu0 %v340
    %986 = vmatprep.subr.bf16.mxu0 %v345
    %987 = vmatpush1.bf16.msra.mxu0 %v344
    %988 = vmatprep.subr.bf16.mxu0 %v349
    %989 = vmatpush1.bf16.msra.mxu0 %v348
    %990 = vmatprep.subr.bf16.mxu0 0
    %991 = vmatpush1.bf16.msra.mxu0 0
    %992 = vmatprep.subr.bf16.mxu0 0
    %993 = vmatpush1.bf16.msra.mxu0 0
    %994 = vmatprep.subr.bf16.mxu0 0
    %995 = vmatpush1.bf16.msra.mxu0 0
    %996 = vmatprep.subr.bf16.mxu0 0
    %997 = vmatpush1.bf16.msra.mxu0 0
    %998 = vmatprep.subr.bf16.mxu0 0
    %999 = vmatpush1.bf16.msra.mxu0 0
    %1000 = vmatprep.subr.bf16.mxu0 0
    %1001 = vmatpush1.bf16.msra.mxu0 0
    %1002 = vmatprep.subr.bf16.mxu0 0
    %1003 = vmatpush1.bf16.msra.mxu0 0
    %1004 = vmatprep.subr.bf16.mxu0 0
    %1005 = vmatpush1.bf16.msra.mxu0 0
    %1006 = vmatprep.mubr.bf16.mxu0 0
    %1007 = vmatmul.mubr.bf16.gmra.mrb[0].mxu0 %v972
    %v1008 = vpop.f32.mrb[0].mxu0
    %v1009 = vadd.f32 0.0, %v1008
    %v1010 = vpop.f32.mrb[0].mxu0
    %v1011 = vadd.f32 0.0, %v1010
    %v1012 = vpop.f32.mrb[0].mxu0
    %v1013 = vpop.f32.mrb[0].mxu0
    %1014 = vdwg.mxu0
    %1015 = vmatprep.subr.bf16.mxu0 %v323
    %1016 = vmatpush1.bf16.msra.mxu0 %v322
    %1017 = vmatprep.subr.bf16.mxu0 %v327
    %1018 = vmatpush1.bf16.msra.mxu0 %v326
    %1019 = vmatprep.subr.bf16.mxu0 %v331
    %1020 = vmatpush1.bf16.msra.mxu0 %v330
    %1021 = vmatprep.subr.bf16.mxu0 %v335
    %1022 = vmatpush1.bf16.msra.mxu0 %v334
    %1023 = vmatprep.subr.bf16.mxu0 %v339
    %1024 = vmatpush1.bf16.msra.mxu0 %v338
    %1025 = vmatprep.subr.bf16.mxu0 %v343
    %1026 = vmatpush1.bf16.msra.mxu0 %v342
    %1027 = vmatprep.subr.bf16.mxu0 %v347
    %1028 = vmatpush1.bf16.msra.mxu0 %v346
    %1029 = vmatprep.subr.bf16.mxu0 %v351
    %1030 = vmatpush1.bf16.msra.mxu0 %v350
    %1031 = vmatprep.subr.bf16.mxu0 0
    %1032 = vmatpush1.bf16.msra.mxu0 0
    %1033 = vmatprep.subr.bf16.mxu0 0
    %1034 = vmatpush1.bf16.msra.mxu0 0
    %1035 = vmatprep.subr.bf16.mxu0 0
    %1036 = vmatpush1.bf16.msra.mxu0 0
    %1037 = vmatprep.subr.bf16.mxu0 0
    %1038 = vmatpush1.bf16.msra.mxu0 0
    %1039 = vmatprep.subr.bf16.mxu0 0
    %1040 = vmatpush1.bf16.msra.mxu0 0
    %1041 = vmatprep.subr.bf16.mxu0 0
    %1042 = vmatpush1.bf16.msra.mxu0 0
    %1043 = vmatprep.subr.bf16.mxu0 0
    %1044 = vmatpush1.bf16.msra.mxu0 0
    %1045 = vmatprep.subr.bf16.mxu0 0
    %1046 = vmatpush1.bf16.msra.mxu0 0
    %1047 = vmatprep.mubr.bf16.mxu0 0
    %1048 = vmatmul.mubr.bf16.gmra.mrb[0].mxu0 %v972
    %v1049 = vpop.f32.mrb[0].mxu0
    %v1050 = vadd.f32 0.0, %v1049
    %v1051 = vpop.f32.mrb[0].mxu0
    %v1052 = vadd.f32 0.0, %v1051
    %v1053 = vpop.f32.mrb[0].mxu0
    %v1054 = vpop.f32.mrb[0].mxu0
    %1055 = vdwg.mxu0
    %v1060 = vcombine.low %v1009, %v1011
    %v1061 = vcombine.low %v1050, %v1052
    %v1063 = vunpack.c.l.s4 1966171168
    %v1064 = vunpack.c.0.s8 %v1063
    %v1065 = vlaneseq
    %v1066 = vshrl.u32 %v1065, 7
    %v1067 = vsub.s32 %v1064, %v1066
    %v1068 = vrot.slane %v1060, %v1067
    %v1070 = vunpack.c.l.s4 1966171168
    %v1071 = vunpack.c.0.s8 %v1070
    %v1072 = vlaneseq
    %v1073 = vshrl.u32 %v1072, 7
    %v1074 = vsub.s32 %v1071, %v1073
    %v1075 = vrot.slane %v1061, %v1074
    %v1076 = vcombine.low %v1068, %v1075
    %v1077 = vcombine.high %v1068, %v1075
    %v1079 = vunpack.c.l.s4 1966171168
    %v1080 = vunpack.c.0.s8 %v1079
    %v1081 = vlaneseq
    %v1082 = vshrl.u32 %v1081, 7
    %v1083 = vsub.s32 %v1080, %v1082
    %v1084 = vrot.slane %v1076, %v1083
    %v1086 = vunpack.c.l.s4 1966171168
    %v1087 = vunpack.c.0.s8 %v1086
    %v1088 = vlaneseq
    %v1089 = vshrl.u32 %v1088, 7
    %v1090 = vsub.s32 %v1087, %v1089
    %v1091 = vrot.slane %v1077, %v1090
    %v1094 = vadd.f32 %v961, %v1084
    %v1095 = vadd.f32 %v963, %v1091
    %v1096 = vmul.f32 %v1094, 0.5
    %v1097 = vmul.f32 %v1095, 0.5
    %v1098 = vtanh.pop %v1096
    %v1099 = vtanh.pop %v1097
    %v1100 = vmul.f32 %v1098, 0.5
    %v1101 = vmul.f32 %v1099, 0.5
    %v1102 = vadd.f32 %v1100, 0.5
    %v1103 = vadd.f32 %v1101, 0.5
    %v1106 = vrot.slane %v1094, 1
    %v1107 = vrot.slane %v1095, 1
    %v1110 = vmul.f32 %v1106, 0.5
    %v1111 = vmul.f32 %v1107, 0.5
    %v1112 = vtanh.pop %v1110
    %v1113 = vtanh.pop %v1111
    %v1114 = vmul.f32 %v1112, 0.5
    %v1115 = vmul.f32 %v1113, 0.5
    %v1116 = vadd.f32 %v1114, 0.5
    %v1117 = vadd.f32 %v1115, 0.5
    %v1118 = vrot.slane %v1094, 2
    %v1119 = vrot.slane %v1095, 2
    %v1122 = vtanh.pop %v1118
    %v1123 = vtanh.pop %v1119
    %v1124 = vrot.slane %v1094, 3
    %v1125 = vrot.slane %v1095, 3
    %v1128 = vmul.f32 %v1124, 0.5
    %v1129 = vmul.f32 %v1125, 0.5
    %v1130 = vtanh.pop %v1128
    %v1131 = vtanh.pop %v1129
    %v1132 = vmul.f32 %v1130, 0.5
    %v1133 = vmul.f32 %v1131, 0.5
    %v1134 = vadd.f32 %v1132, 0.5
    %v1135 = vadd.f32 %v1133, 0.5
    %v1136 = vmul.f32 %v1116, %v952
    %v1137 = vmul.f32 %v1117, %v953
    %v1138 = vmul.f32 %v1102, %v1122
    %v1139 = vmul.f32 %v1103, %v1123
    %v1140 = vadd.f32 %v1136, %v1138
    %v1141 = vadd.f32 %v1137, %v1139
    %v1142 = vtanh.pop %v1140
    %v1143 = vtanh.pop %v1141
    %v1144 = vmul.f32 %v1134, %v1142
    %v1145 = vmul.f32 %v1135, %v1143
    %1146 = vst [vmem:[#allocation3 + $0x3] sm:$0x1] %v1144
    %1147 = vst [vmem:[#allocation3 + $0xb] sm:$0x1] %v1145
    %s1148 = scalar_lea.vmem [#allocation2], 4
    %v1149 = vld [vmem:[%s1148] ss:$8 sm:$0xf]
    %s1150 = scalar_lea.vmem [#allocation2], 36
    %v1151 = vld [vmem:[%s1150] ss:$8 sm:$0xf]
    %v1152 = vpack.c.bf16 %v1144, %v1144
    %v1153 = vpack.c.bf16 %v1145, %v1145
    %v1156 = vunpack.c.l.b16 %v1152
    %v1157 = vunpack.c.l.b16 %v1153
    %v1158 = vrot.slane %v1157, 7
    %v1159 = vsel %vm594, %v1158, %v1156
    %v1160 = vpack.c.b16 %v1159, %v1159
    %1162 = vmatprep.subr.bf16.mxu0 %v321
    %1163 = vmatpush1.bf16.msra.mxu0 %v320
    %1164 = vmatprep.subr.bf16.mxu0 %v325
    %1165 = vmatpush1.bf16.msra.mxu0 %v324
    %1166 = vmatprep.subr.bf16.mxu0 %v329
    %1167 = vmatpush1.bf16.msra.mxu0 %v328
    %1168 = vmatprep.subr.bf16.mxu0 %v333
    %1169 = vmatpush1.bf16.msra.mxu0 %v332
    %1170 = vmatprep.subr.bf16.mxu0 %v337
    %1171 = vmatpush1.bf16.msra.mxu0 %v336
    %1172 = vmatprep.subr.bf16.mxu0 %v341
    %1173 = vmatpush1.bf16.msra.mxu0 %v340
    %1174 = vmatprep.subr.bf16.mxu0 %v345
    %1175 = vmatpush1.bf16.msra.mxu0 %v344
    %1176 = vmatprep.subr.bf16.mxu0 %v349
    %1177 = vmatpush1.bf16.msra.mxu0 %v348
    %1178 = vmatprep.subr.bf16.mxu0 0
    %1179 = vmatpush1.bf16.msra.mxu0 0
    %1180 = vmatprep.subr.bf16.mxu0 0
    %1181 = vmatpush1.bf16.msra.mxu0 0
    %1182 = vmatprep.subr.bf16.mxu0 0
    %1183 = vmatpush1.bf16.msra.mxu0 0
    %1184 = vmatprep.subr.bf16.mxu0 0
    %1185 = vmatpush1.bf16.msra.mxu0 0
    %1186 = vmatprep.subr.bf16.mxu0 0
    %1187 = vmatpush1.bf16.msra.mxu0 0
    %1188 = vmatprep.subr.bf16.mxu0 0
    %1189 = vmatpush1.bf16.msra.mxu0 0
    %1190 = vmatprep.subr.bf16.mxu0 0
    %1191 = vmatpush1.bf16.msra.mxu0 0
    %1192 = vmatprep.subr.bf16.mxu0 0
    %1193 = vmatpush1.bf16.msra.mxu0 0
    %1194 = vmatprep.mubr.bf16.mxu0 0
    %1195 = vmatmul.mubr.bf16.gmra.mrb[0].mxu0 %v1160
    %v1196 = vpop.f32.mrb[0].mxu0
    %v1197 = vadd.f32 0.0, %v1196
    %v1198 = vpop.f32.mrb[0].mxu0
    %v1199 = vadd.f32 0.0, %v1198
    %v1200 = vpop.f32.mrb[0].mxu0
    %v1201 = vpop.f32.mrb[0].mxu0
    %1202 = vdwg.mxu0
    %1203 = vmatprep.subr.bf16.mxu0 %v323
    %1204 = vmatpush1.bf16.msra.mxu0 %v322
    %1205 = vmatprep.subr.bf16.mxu0 %v327
    %1206 = vmatpush1.bf16.msra.mxu0 %v326
    %1207 = vmatprep.subr.bf16.mxu0 %v331
    %1208 = vmatpush1.bf16.msra.mxu0 %v330
    %1209 = vmatprep.subr.bf16.mxu0 %v335
    %1210 = vmatpush1.bf16.msra.mxu0 %v334
    %1211 = vmatprep.subr.bf16.mxu0 %v339
    %1212 = vmatpush1.bf16.msra.mxu0 %v338
    %1213 = vmatprep.subr.bf16.mxu0 %v343
    %1214 = vmatpush1.bf16.msra.mxu0 %v342
    %1215 = vmatprep.subr.bf16.mxu0 %v347
    %1216 = vmatpush1.bf16.msra.mxu0 %v346
    %1217 = vmatprep.subr.bf16.mxu0 %v351
    %1218 = vmatpush1.bf16.msra.mxu0 %v350
    %1219 = vmatprep.subr.bf16.mxu0 0
    %1220 = vmatpush1.bf16.msra.mxu0 0
    %1221 = vmatprep.subr.bf16.mxu0 0
    %1222 = vmatpush1.bf16.msra.mxu0 0
    %1223 = vmatprep.subr.bf16.mxu0 0
    %1224 = vmatpush1.bf16.msra.mxu0 0
    %1225 = vmatprep.subr.bf16.mxu0 0
    %1226 = vmatpush1.bf16.msra.mxu0 0
    %1227 = vmatprep.subr.bf16.mxu0 0
    %1228 = vmatpush1.bf16.msra.mxu0 0
    %1229 = vmatprep.subr.bf16.mxu0 0
    %1230 = vmatpush1.bf16.msra.mxu0 0
    %1231 = vmatprep.subr.bf16.mxu0 0
    %1232 = vmatpush1.bf16.msra.mxu0 0
    %1233 = vmatprep.subr.bf16.mxu0 0
    %1234 = vmatpush1.bf16.msra.mxu0 0
    %1235 = vmatprep.mubr.bf16.mxu0 0
    %1236 = vmatmul.mubr.bf16.gmra.mrb[0].mxu0 %v1160
    %v1237 = vpop.f32.mrb[0].mxu0
    %v1238 = vadd.f32 0.0, %v1237
    %v1239 = vpop.f32.mrb[0].mxu0
    %v1240 = vadd.f32 0.0, %v1239
    %v1241 = vpop.f32.mrb[0].mxu0
    %v1242 = vpop.f32.mrb[0].mxu0
    %1243 = vdwg.mxu0
    %v1248 = vcombine.low %v1197, %v1199
    %v1249 = vcombine.low %v1238, %v1240
    %v1251 = vunpack.c.l.s4 1966171168
    %v1252 = vunpack.c.0.s8 %v1251
    %v1253 = vlaneseq
    %v1254 = vshrl.u32 %v1253, 7
    %v1255 = vsub.s32 %v1252, %v1254
    %v1256 = vrot.slane %v1248, %v1255
    %v1258 = vunpack.c.l.s4 1966171168
    %v1259 = vunpack.c.0.s8 %v1258
    %v1260 = vlaneseq
    %v1261 = vshrl.u32 %v1260, 7
    %v1262 = vsub.s32 %v1259, %v1261
    %v1263 = vrot.slane %v1249, %v1262
    %v1264 = vcombine.low %v1256, %v1263
    %v1265 = vcombine.high %v1256, %v1263
    %v1267 = vunpack.c.l.s4 1966171168
    %v1268 = vunpack.c.0.s8 %v1267
    %v1269 = vlaneseq
    %v1270 = vshrl.u32 %v1269, 7
    %v1271 = vsub.s32 %v1268, %v1270
    %v1272 = vrot.slane %v1264, %v1271
    %v1274 = vunpack.c.l.s4 1966171168
    %v1275 = vunpack.c.0.s8 %v1274
    %v1276 = vlaneseq
    %v1277 = vshrl.u32 %v1276, 7
    %v1278 = vsub.s32 %v1275, %v1277
    %v1279 = vrot.slane %v1265, %v1278
    %v1282 = vadd.f32 %v1149, %v1272
    %v1283 = vadd.f32 %v1151, %v1279
    %v1284 = vmul.f32 %v1282, 0.5
    %v1285 = vmul.f32 %v1283, 0.5
    %v1286 = vtanh.pop %v1284
    %v1287 = vtanh.pop %v1285
    %v1288 = vmul.f32 %v1286, 0.5
    %v1289 = vmul.f32 %v1287, 0.5
    %v1290 = vadd.f32 %v1288, 0.5
    %v1291 = vadd.f32 %v1289, 0.5
    %v1294 = vrot.slane %v1282, 1
    %v1295 = vrot.slane %v1283, 1
    %v1298 = vmul.f32 %v1294, 0.5
    %v1299 = vmul.f32 %v1295, 0.5
    %v1300 = vtanh.pop %v1298
    %v1301 = vtanh.pop %v1299
    %v1302 = vmul.f32 %v1300, 0.5
    %v1303 = vmul.f32 %v1301, 0.5
    %v1304 = vadd.f32 %v1302, 0.5
    %v1305 = vadd.f32 %v1303, 0.5
    %v1306 = vrot.slane %v1282, 2
    %v1307 = vrot.slane %v1283, 2
    %v1310 = vtanh.pop %v1306
    %v1311 = vtanh.pop %v1307
    %v1312 = vrot.slane %v1282, 3
    %v1313 = vrot.slane %v1283, 3
    %v1316 = vmul.f32 %v1312, 0.5
    %v1317 = vmul.f32 %v1313, 0.5
    %v1318 = vtanh.pop %v1316
    %v1319 = vtanh.pop %v1317
    %v1320 = vmul.f32 %v1318, 0.5
    %v1321 = vmul.f32 %v1319, 0.5
    %v1322 = vadd.f32 %v1320, 0.5
    %v1323 = vadd.f32 %v1321, 0.5
    %v1324 = vmul.f32 %v1304, %v1140
    %v1325 = vmul.f32 %v1305, %v1141
    %v1326 = vmul.f32 %v1290, %v1310
    %v1327 = vmul.f32 %v1291, %v1311
    %v1328 = vadd.f32 %v1324, %v1326
    %v1329 = vadd.f32 %v1325, %v1327
    %v1330 = vtanh.pop %v1328
    %v1331 = vtanh.pop %v1329
    %v1332 = vmul.f32 %v1322, %v1330
    %v1333 = vmul.f32 %v1323, %v1331
    %1334 = vst [vmem:[#allocation3 + $0x4] sm:$0x1] %v1332
    %1335 = vst [vmem:[#allocation3 + $0xc] sm:$0x1] %v1333
    %s1336 = scalar_lea.vmem [#allocation2], 5
    %v1337 = vld [vmem:[%s1336] ss:$8 sm:$0xf]
    %s1338 = scalar_lea.vmem [#allocation2], 37
    %v1339 = vld [vmem:[%s1338] ss:$8 sm:$0xf]
    %v1340 = vpack.c.bf16 %v1332, %v1332
    %v1341 = vpack.c.bf16 %v1333, %v1333
    %v1344 = vunpack.c.l.b16 %v1340
    %v1345 = vunpack.c.l.b16 %v1341
    %v1346 = vrot.slane %v1345, 7
    %v1347 = vsel %vm594, %v1346, %v1344
    %v1348 = vpack.c.b16 %v1347, %v1347
    %1350 = vmatprep.subr.bf16.mxu0 %v321
    %1351 = vmatpush1.bf16.msra.mxu0 %v320
    %1352 = vmatprep.subr.bf16.mxu0 %v325
    %1353 = vmatpush1.bf16.msra.mxu0 %v324
    %1354 = vmatprep.subr.bf16.mxu0 %v329
    %1355 = vmatpush1.bf16.msra.mxu0 %v328
    %1356 = vmatprep.subr.bf16.mxu0 %v333
    %1357 = vmatpush1.bf16.msra.mxu0 %v332
    %1358 = vmatprep.subr.bf16.mxu0 %v337
    %1359 = vmatpush1.bf16.msra.mxu0 %v336
    %1360 = vmatprep.subr.bf16.mxu0 %v341
    %1361 = vmatpush1.bf16.msra.mxu0 %v340
    %1362 = vmatprep.subr.bf16.mxu0 %v345
    %1363 = vmatpush1.bf16.msra.mxu0 %v344
    %1364 = vmatprep.subr.bf16.mxu0 %v349
    %1365 = vmatpush1.bf16.msra.mxu0 %v348
    %1366 = vmatprep.subr.bf16.mxu0 0
    %1367 = vmatpush1.bf16.msra.mxu0 0
    %1368 = vmatprep.subr.bf16.mxu0 0
    %1369 = vmatpush1.bf16.msra.mxu0 0
    %1370 = vmatprep.subr.bf16.mxu0 0
    %1371 = vmatpush1.bf16.msra.mxu0 0
    %1372 = vmatprep.subr.bf16.mxu0 0
    %1373 = vmatpush1.bf16.msra.mxu0 0
    %1374 = vmatprep.subr.bf16.mxu0 0
    %1375 = vmatpush1.bf16.msra.mxu0 0
    %1376 = vmatprep.subr.bf16.mxu0 0
    %1377 = vmatpush1.bf16.msra.mxu0 0
    %1378 = vmatprep.subr.bf16.mxu0 0
    %1379 = vmatpush1.bf16.msra.mxu0 0
    %1380 = vmatprep.subr.bf16.mxu0 0
    %1381 = vmatpush1.bf16.msra.mxu0 0
    %1382 = vmatprep.mubr.bf16.mxu0 0
    %1383 = vmatmul.mubr.bf16.gmra.mrb[0].mxu0 %v1348
    %v1384 = vpop.f32.mrb[0].mxu0
    %v1385 = vadd.f32 0.0, %v1384
    %v1386 = vpop.f32.mrb[0].mxu0
    %v1387 = vadd.f32 0.0, %v1386
    %v1388 = vpop.f32.mrb[0].mxu0
    %v1389 = vpop.f32.mrb[0].mxu0
    %1390 = vdwg.mxu0
    %1391 = vmatprep.subr.bf16.mxu0 %v323
    %1392 = vmatpush1.bf16.msra.mxu0 %v322
    %1393 = vmatprep.subr.bf16.mxu0 %v327
    %1394 = vmatpush1.bf16.msra.mxu0 %v326
    %1395 = vmatprep.subr.bf16.mxu0 %v331
    %1396 = vmatpush1.bf16.msra.mxu0 %v330
    %1397 = vmatprep.subr.bf16.mxu0 %v335
    %1398 = vmatpush1.bf16.msra.mxu0 %v334
    %1399 = vmatprep.subr.bf16.mxu0 %v339
    %1400 = vmatpush1.bf16.msra.mxu0 %v338
    %1401 = vmatprep.subr.bf16.mxu0 %v343
    %1402 = vmatpush1.bf16.msra.mxu0 %v342
    %1403 = vmatprep.subr.bf16.mxu0 %v347
    %1404 = vmatpush1.bf16.msra.mxu0 %v346
    %1405 = vmatprep.subr.bf16.mxu0 %v351
    %1406 = vmatpush1.bf16.msra.mxu0 %v350
    %1407 = vmatprep.subr.bf16.mxu0 0
    %1408 = vmatpush1.bf16.msra.mxu0 0
    %1409 = vmatprep.subr.bf16.mxu0 0
    %1410 = vmatpush1.bf16.msra.mxu0 0
    %1411 = vmatprep.subr.bf16.mxu0 0
    %1412 = vmatpush1.bf16.msra.mxu0 0
    %1413 = vmatprep.subr.bf16.mxu0 0
    %1414 = vmatpush1.bf16.msra.mxu0 0
    %1415 = vmatprep.subr.bf16.mxu0 0
    %1416 = vmatpush1.bf16.msra.mxu0 0
    %1417 = vmatprep.subr.bf16.mxu0 0
    %1418 = vmatpush1.bf16.msra.mxu0 0
    %1419 = vmatprep.subr.bf16.mxu0 0
    %1420 = vmatpush1.bf16.msra.mxu0 0
    %1421 = vmatprep.subr.bf16.mxu0 0
    %1422 = vmatpush1.bf16.msra.mxu0 0
    %1423 = vmatprep.mubr.bf16.mxu0 0
    %1424 = vmatmul.mubr.bf16.gmra.mrb[0].mxu0 %v1348
    %v1425 = vpop.f32.mrb[0].mxu0
    %v1426 = vadd.f32 0.0, %v1425
    %v1427 = vpop.f32.mrb[0].mxu0
    %v1428 = vadd.f32 0.0, %v1427
    %v1429 = vpop.f32.mrb[0].mxu0
    %v1430 = vpop.f32.mrb[0].mxu0
    %1431 = vdwg.mxu0
    %v1436 = vcombine.low %v1385, %v1387
    %v1437 = vcombine.low %v1426, %v1428
    %v1439 = vunpack.c.l.s4 1966171168
    %v1440 = vunpack.c.0.s8 %v1439
    %v1441 = vlaneseq
    %v1442 = vshrl.u32 %v1441, 7
    %v1443 = vsub.s32 %v1440, %v1442
    %v1444 = vrot.slane %v1436, %v1443
    %v1446 = vunpack.c.l.s4 1966171168
    %v1447 = vunpack.c.0.s8 %v1446
    %v1448 = vlaneseq
    %v1449 = vshrl.u32 %v1448, 7
    %v1450 = vsub.s32 %v1447, %v1449
    %v1451 = vrot.slane %v1437, %v1450
    %v1452 = vcombine.low %v1444, %v1451
    %v1453 = vcombine.high %v1444, %v1451
    %v1455 = vunpack.c.l.s4 1966171168
    %v1456 = vunpack.c.0.s8 %v1455
    %v1457 = vlaneseq
    %v1458 = vshrl.u32 %v1457, 7
    %v1459 = vsub.s32 %v1456, %v1458
    %v1460 = vrot.slane %v1452, %v1459
    %v1462 = vunpack.c.l.s4 1966171168
    %v1463 = vunpack.c.0.s8 %v1462
    %v1464 = vlaneseq
    %v1465 = vshrl.u32 %v1464, 7
    %v1466 = vsub.s32 %v1463, %v1465
    %v1467 = vrot.slane %v1453, %v1466
    %v1470 = vadd.f32 %v1337, %v1460
    %v1471 = vadd.f32 %v1339, %v1467
    %v1472 = vmul.f32 %v1470, 0.5
    %v1473 = vmul.f32 %v1471, 0.5
    %v1474 = vtanh.pop %v1472
    %v1475 = vtanh.pop %v1473
    %v1476 = vmul.f32 %v1474, 0.5
    %v1477 = vmul.f32 %v1475, 0.5
    %v1478 = vadd.f32 %v1476, 0.5
    %v1479 = vadd.f32 %v1477, 0.5
    %v1482 = vrot.slane %v1470, 1
    %v1483 = vrot.slane %v1471, 1
    %v1486 = vmul.f32 %v1482, 0.5
    %v1487 = vmul.f32 %v1483, 0.5
    %v1488 = vtanh.pop %v1486
    %v1489 = vtanh.pop %v1487
    %v1490 = vmul.f32 %v1488, 0.5
    %v1491 = vmul.f32 %v1489, 0.5
    %v1492 = vadd.f32 %v1490, 0.5
    %v1493 = vadd.f32 %v1491, 0.5
    %v1494 = vrot.slane %v1470, 2
    %v1495 = vrot.slane %v1471, 2
    %v1498 = vtanh.pop %v1494
    %v1499 = vtanh.pop %v1495
    %v1500 = vrot.slane %v1470, 3
    %v1501 = vrot.slane %v1471, 3
    %v1504 = vmul.f32 %v1500, 0.5
    %v1505 = vmul.f32 %v1501, 0.5
    %v1506 = vtanh.pop %v1504
    %v1507 = vtanh.pop %v1505
    %v1508 = vmul.f32 %v1506, 0.5
    %v1509 = vmul.f32 %v1507, 0.5
    %v1510 = vadd.f32 %v1508, 0.5
    %v1511 = vadd.f32 %v1509, 0.5
    %v1512 = vmul.f32 %v1492, %v1328
    %v1513 = vmul.f32 %v1493, %v1329
    %v1514 = vmul.f32 %v1478, %v1498
    %v1515 = vmul.f32 %v1479, %v1499
    %v1516 = vadd.f32 %v1512, %v1514
    %v1517 = vadd.f32 %v1513, %v1515
    %v1518 = vtanh.pop %v1516
    %v1519 = vtanh.pop %v1517
    %v1520 = vmul.f32 %v1510, %v1518
    %v1521 = vmul.f32 %v1511, %v1519
    %1522 = vst [vmem:[#allocation3 + $0x5] sm:$0x1] %v1520
    %1523 = vst [vmem:[#allocation3 + $0xd] sm:$0x1] %v1521
    %s1524 = scalar_lea.vmem [#allocation2], 6
    %v1525 = vld [vmem:[%s1524] ss:$8 sm:$0xf]
    %s1526 = scalar_lea.vmem [#allocation2], 38
    %v1527 = vld [vmem:[%s1526] ss:$8 sm:$0xf]
    %v1528 = vpack.c.bf16 %v1520, %v1520
    %v1529 = vpack.c.bf16 %v1521, %v1521
    %v1532 = vunpack.c.l.b16 %v1528
    %v1533 = vunpack.c.l.b16 %v1529
    %v1534 = vrot.slane %v1533, 7
    %v1535 = vsel %vm594, %v1534, %v1532
    %v1536 = vpack.c.b16 %v1535, %v1535
    %1538 = vmatprep.subr.bf16.mxu0 %v321
    %1539 = vmatpush1.bf16.msra.mxu0 %v320
    %1540 = vmatprep.subr.bf16.mxu0 %v325
    %1541 = vmatpush1.bf16.msra.mxu0 %v324
    %1542 = vmatprep.subr.bf16.mxu0 %v329
    %1543 = vmatpush1.bf16.msra.mxu0 %v328
    %1544 = vmatprep.subr.bf16.mxu0 %v333
    %1545 = vmatpush1.bf16.msra.mxu0 %v332
    %1546 = vmatprep.subr.bf16.mxu0 %v337
    %1547 = vmatpush1.bf16.msra.mxu0 %v336
    %1548 = vmatprep.subr.bf16.mxu0 %v341
    %1549 = vmatpush1.bf16.msra.mxu0 %v340
    %1550 = vmatprep.subr.bf16.mxu0 %v345
    %1551 = vmatpush1.bf16.msra.mxu0 %v344
    %1552 = vmatprep.subr.bf16.mxu0 %v349
    %1553 = vmatpush1.bf16.msra.mxu0 %v348
    %1554 = vmatprep.subr.bf16.mxu0 0
    %1555 = vmatpush1.bf16.msra.mxu0 0
    %1556 = vmatprep.subr.bf16.mxu0 0
    %1557 = vmatpush1.bf16.msra.mxu0 0
    %1558 = vmatprep.subr.bf16.mxu0 0
    %1559 = vmatpush1.bf16.msra.mxu0 0
    %1560 = vmatprep.subr.bf16.mxu0 0
    %1561 = vmatpush1.bf16.msra.mxu0 0
    %1562 = vmatprep.subr.bf16.mxu0 0
    %1563 = vmatpush1.bf16.msra.mxu0 0
    %1564 = vmatprep.subr.bf16.mxu0 0
    %1565 = vmatpush1.bf16.msra.mxu0 0
    %1566 = vmatprep.subr.bf16.mxu0 0
    %1567 = vmatpush1.bf16.msra.mxu0 0
    %1568 = vmatprep.subr.bf16.mxu0 0
    %1569 = vmatpush1.bf16.msra.mxu0 0
    %1570 = vmatprep.mubr.bf16.mxu0 0
    %1571 = vmatmul.mubr.bf16.gmra.mrb[0].mxu0 %v1536
    %v1572 = vpop.f32.mrb[0].mxu0
    %v1573 = vadd.f32 0.0, %v1572
    %v1574 = vpop.f32.mrb[0].mxu0
    %v1575 = vadd.f32 0.0, %v1574
    %v1576 = vpop.f32.mrb[0].mxu0
    %v1577 = vpop.f32.mrb[0].mxu0
    %1578 = vdwg.mxu0
    %1579 = vmatprep.subr.bf16.mxu0 %v323
    %1580 = vmatpush1.bf16.msra.mxu0 %v322
    %1581 = vmatprep.subr.bf16.mxu0 %v327
    %1582 = vmatpush1.bf16.msra.mxu0 %v326
    %1583 = vmatprep.subr.bf16.mxu0 %v331
    %1584 = vmatpush1.bf16.msra.mxu0 %v330
    %1585 = vmatprep.subr.bf16.mxu0 %v335
    %1586 = vmatpush1.bf16.msra.mxu0 %v334
    %1587 = vmatprep.subr.bf16.mxu0 %v339
    %1588 = vmatpush1.bf16.msra.mxu0 %v338
    %1589 = vmatprep.subr.bf16.mxu0 %v343
    %1590 = vmatpush1.bf16.msra.mxu0 %v342
    %1591 = vmatprep.subr.bf16.mxu0 %v347
    %1592 = vmatpush1.bf16.msra.mxu0 %v346
    %1593 = vmatprep.subr.bf16.mxu0 %v351
    %1594 = vmatpush1.bf16.msra.mxu0 %v350
    %1595 = vmatprep.subr.bf16.mxu0 0
    %1596 = vmatpush1.bf16.msra.mxu0 0
    %1597 = vmatprep.subr.bf16.mxu0 0
    %1598 = vmatpush1.bf16.msra.mxu0 0
    %1599 = vmatprep.subr.bf16.mxu0 0
    %1600 = vmatpush1.bf16.msra.mxu0 0
    %1601 = vmatprep.subr.bf16.mxu0 0
    %1602 = vmatpush1.bf16.msra.mxu0 0
    %1603 = vmatprep.subr.bf16.mxu0 0
    %1604 = vmatpush1.bf16.msra.mxu0 0
    %1605 = vmatprep.subr.bf16.mxu0 0
    %1606 = vmatpush1.bf16.msra.mxu0 0
    %1607 = vmatprep.subr.bf16.mxu0 0
    %1608 = vmatpush1.bf16.msra.mxu0 0
    %1609 = vmatprep.subr.bf16.mxu0 0
    %1610 = vmatpush1.bf16.msra.mxu0 0
    %1611 = vmatprep.mubr.bf16.mxu0 0
    %1612 = vmatmul.mubr.bf16.gmra.mrb[0].mxu0 %v1536
    %v1613 = vpop.f32.mrb[0].mxu0
    %v1614 = vadd.f32 0.0, %v1613
    %v1615 = vpop.f32.mrb[0].mxu0
    %v1616 = vadd.f32 0.0, %v1615
    %v1617 = vpop.f32.mrb[0].mxu0
    %v1618 = vpop.f32.mrb[0].mxu0
    %1619 = vdwg.mxu0
    %v1624 = vcombine.low %v1573, %v1575
    %v1625 = vcombine.low %v1614, %v1616
    %v1627 = vunpack.c.l.s4 1966171168
    %v1628 = vunpack.c.0.s8 %v1627
    %v1629 = vlaneseq
    %v1630 = vshrl.u32 %v1629, 7
    %v1631 = vsub.s32 %v1628, %v1630
    %v1632 = vrot.slane %v1624, %v1631
    %v1634 = vunpack.c.l.s4 1966171168
    %v1635 = vunpack.c.0.s8 %v1634
    %v1636 = vlaneseq
    %v1637 = vshrl.u32 %v1636, 7
    %v1638 = vsub.s32 %v1635, %v1637
    %v1639 = vrot.slane %v1625, %v1638
    %v1640 = vcombine.low %v1632, %v1639
    %v1641 = vcombine.high %v1632, %v1639
    %v1643 = vunpack.c.l.s4 1966171168
    %v1644 = vunpack.c.0.s8 %v1643
    %v1645 = vlaneseq
    %v1646 = vshrl.u32 %v1645, 7
    %v1647 = vsub.s32 %v1644, %v1646
    %v1648 = vrot.slane %v1640, %v1647
    %v1650 = vunpack.c.l.s4 1966171168
    %v1651 = vunpack.c.0.s8 %v1650
    %v1652 = vlaneseq
    %v1653 = vshrl.u32 %v1652, 7
    %v1654 = vsub.s32 %v1651, %v1653
    %v1655 = vrot.slane %v1641, %v1654
    %v1658 = vadd.f32 %v1525, %v1648
    %v1659 = vadd.f32 %v1527, %v1655
    %v1660 = vmul.f32 %v1658, 0.5
    %v1661 = vmul.f32 %v1659, 0.5
    %v1662 = vtanh.pop %v1660
    %v1663 = vtanh.pop %v1661
    %v1664 = vmul.f32 %v1662, 0.5
    %v1665 = vmul.f32 %v1663, 0.5
    %v1666 = vadd.f32 %v1664, 0.5
    %v1667 = vadd.f32 %v1665, 0.5
    %v1670 = vrot.slane %v1658, 1
    %v1671 = vrot.slane %v1659, 1
    %v1674 = vmul.f32 %v1670, 0.5
    %v1675 = vmul.f32 %v1671, 0.5
    %v1676 = vtanh.pop %v1674
    %v1677 = vtanh.pop %v1675
    %v1678 = vmul.f32 %v1676, 0.5
    %v1679 = vmul.f32 %v1677, 0.5
    %v1680 = vadd.f32 %v1678, 0.5
    %v1681 = vadd.f32 %v1679, 0.5
    %v1682 = vrot.slane %v1658, 2
    %v1683 = vrot.slane %v1659, 2
    %v1686 = vtanh.pop %v1682
    %v1687 = vtanh.pop %v1683
    %v1688 = vrot.slane %v1658, 3
    %v1689 = vrot.slane %v1659, 3
    %v1692 = vmul.f32 %v1688, 0.5
    %v1693 = vmul.f32 %v1689, 0.5
    %v1694 = vtanh.pop %v1692
    %v1695 = vtanh.pop %v1693
    %v1696 = vmul.f32 %v1694, 0.5
    %v1697 = vmul.f32 %v1695, 0.5
    %v1698 = vadd.f32 %v1696, 0.5
    %v1699 = vadd.f32 %v1697, 0.5
    %v1700 = vmul.f32 %v1680, %v1516
    %v1701 = vmul.f32 %v1681, %v1517
    %v1702 = vmul.f32 %v1666, %v1686
    %v1703 = vmul.f32 %v1667, %v1687
    %v1704 = vadd.f32 %v1700, %v1702
    %v1705 = vadd.f32 %v1701, %v1703
    %v1706 = vtanh.pop %v1704
    %v1707 = vtanh.pop %v1705
    %v1708 = vmul.f32 %v1698, %v1706
    %v1709 = vmul.f32 %v1699, %v1707
    %1710 = vst [vmem:[#allocation3 + $0x6] sm:$0x1] %v1708
    %1711 = vst [vmem:[#allocation3 + $0xe] sm:$0x1] %v1709
    %s1712 = scalar_lea.vmem [#allocation2], 7
    %v1713 = vld [vmem:[%s1712] ss:$8 sm:$0xf]
    %s1714 = scalar_lea.vmem [#allocation2], 39
    %v1715 = vld [vmem:[%s1714] ss:$8 sm:$0xf]
    %v1716 = vpack.c.bf16 %v1708, %v1708
    %v1717 = vpack.c.bf16 %v1709, %v1709
    %v1720 = vunpack.c.l.b16 %v1716
    %v1721 = vunpack.c.l.b16 %v1717
    %v1722 = vrot.slane %v1721, 7
    %v1723 = vsel %vm594, %v1722, %v1720
    %v1724 = vpack.c.b16 %v1723, %v1723
    %1726 = vmatprep.subr.bf16.mxu0 %v321
    %1727 = vmatpush1.bf16.msra.mxu0 %v320
    %1728 = vmatprep.subr.bf16.mxu0 %v325
    %1729 = vmatpush1.bf16.msra.mxu0 %v324
    %1730 = vmatprep.subr.bf16.mxu0 %v329
    %1731 = vmatpush1.bf16.msra.mxu0 %v328
    %1732 = vmatprep.subr.bf16.mxu0 %v333
    %1733 = vmatpush1.bf16.msra.mxu0 %v332
    %1734 = vmatprep.subr.bf16.mxu0 %v337
    %1735 = vmatpush1.bf16.msra.mxu0 %v336
    %1736 = vmatprep.subr.bf16.mxu0 %v341
    %1737 = vmatpush1.bf16.msra.mxu0 %v340
    %1738 = vmatprep.subr.bf16.mxu0 %v345
    %1739 = vmatpush1.bf16.msra.mxu0 %v344
    %1740 = vmatprep.subr.bf16.mxu0 %v349
    %1741 = vmatpush1.bf16.msra.mxu0 %v348
    %1742 = vmatprep.subr.bf16.mxu0 0
    %1743 = vmatpush1.bf16.msra.mxu0 0
    %1744 = vmatprep.subr.bf16.mxu0 0
    %1745 = vmatpush1.bf16.msra.mxu0 0
    %1746 = vmatprep.subr.bf16.mxu0 0
    %1747 = vmatpush1.bf16.msra.mxu0 0
    %1748 = vmatprep.subr.bf16.mxu0 0
    %1749 = vmatpush1.bf16.msra.mxu0 0
    %1750 = vmatprep.subr.bf16.mxu0 0
    %1751 = vmatpush1.bf16.msra.mxu0 0
    %1752 = vmatprep.subr.bf16.mxu0 0
    %1753 = vmatpush1.bf16.msra.mxu0 0
    %1754 = vmatprep.subr.bf16.mxu0 0
    %1755 = vmatpush1.bf16.msra.mxu0 0
    %1756 = vmatprep.subr.bf16.mxu0 0
    %1757 = vmatpush1.bf16.msra.mxu0 0
    %1758 = vmatprep.mubr.bf16.mxu0 0
    %1759 = vmatmul.mubr.bf16.gmra.mrb[0].mxu0 %v1724
    %v1760 = vpop.f32.mrb[0].mxu0
    %v1761 = vadd.f32 0.0, %v1760
    %v1762 = vpop.f32.mrb[0].mxu0
    %v1763 = vadd.f32 0.0, %v1762
    %v1764 = vpop.f32.mrb[0].mxu0
    %v1765 = vpop.f32.mrb[0].mxu0
    %1766 = vdwg.mxu0
    %1767 = vmatprep.subr.bf16.mxu0 %v323
    %1768 = vmatpush1.bf16.msra.mxu0 %v322
    %1769 = vmatprep.subr.bf16.mxu0 %v327
    %1770 = vmatpush1.bf16.msra.mxu0 %v326
    %1771 = vmatprep.subr.bf16.mxu0 %v331
    %1772 = vmatpush1.bf16.msra.mxu0 %v330
    %1773 = vmatprep.subr.bf16.mxu0 %v335
    %1774 = vmatpush1.bf16.msra.mxu0 %v334
    %1775 = vmatprep.subr.bf16.mxu0 %v339
    %1776 = vmatpush1.bf16.msra.mxu0 %v338
    %1777 = vmatprep.subr.bf16.mxu0 %v343
    %1778 = vmatpush1.bf16.msra.mxu0 %v342
    %1779 = vmatprep.subr.bf16.mxu0 %v347
    %1780 = vmatpush1.bf16.msra.mxu0 %v346
    %1781 = vmatprep.subr.bf16.mxu0 %v351
    %1782 = vmatpush1.bf16.msra.mxu0 %v350
    %1783 = vmatprep.subr.bf16.mxu0 0
    %1784 = vmatpush1.bf16.msra.mxu0 0
    %1785 = vmatprep.subr.bf16.mxu0 0
    %1786 = vmatpush1.bf16.msra.mxu0 0
    %1787 = vmatprep.subr.bf16.mxu0 0
    %1788 = vmatpush1.bf16.msra.mxu0 0
    %1789 = vmatprep.subr.bf16.mxu0 0
    %1790 = vmatpush1.bf16.msra.mxu0 0
    %1791 = vmatprep.subr.bf16.mxu0 0
    %1792 = vmatpush1.bf16.msra.mxu0 0
    %1793 = vmatprep.subr.bf16.mxu0 0
    %1794 = vmatpush1.bf16.msra.mxu0 0
    %1795 = vmatprep.subr.bf16.mxu0 0
    %1796 = vmatpush1.bf16.msra.mxu0 0
    %1797 = vmatprep.subr.bf16.mxu0 0
    %1798 = vmatpush1.bf16.msra.mxu0 0
    %1799 = vmatprep.mubr.bf16.mxu0 0
    %1800 = vmatmul.mubr.bf16.gmra.mrb[0].mxu0 %v1724
    %v1801 = vpop.f32.mrb[0].mxu0
    %v1802 = vadd.f32 0.0, %v1801
    %v1803 = vpop.f32.mrb[0].mxu0
    %v1804 = vadd.f32 0.0, %v1803
    %v1805 = vpop.f32.mrb[0].mxu0
    %v1806 = vpop.f32.mrb[0].mxu0
    %1807 = vdwg.mxu0
    %v1812 = vcombine.low %v1761, %v1763
    %v1813 = vcombine.low %v1802, %v1804
    %v1815 = vunpack.c.l.s4 1966171168
    %v1816 = vunpack.c.0.s8 %v1815
    %v1817 = vlaneseq
    %v1818 = vshrl.u32 %v1817, 7
    %v1819 = vsub.s32 %v1816, %v1818
    %v1820 = vrot.slane %v1812, %v1819
    %v1822 = vunpack.c.l.s4 1966171168
    %v1823 = vunpack.c.0.s8 %v1822
    %v1824 = vlaneseq
    %v1825 = vshrl.u32 %v1824, 7
    %v1826 = vsub.s32 %v1823, %v1825
    %v1827 = vrot.slane %v1813, %v1826
    %v1828 = vcombine.low %v1820, %v1827
    %v1829 = vcombine.high %v1820, %v1827
    %v1831 = vunpack.c.l.s4 1966171168
    %v1832 = vunpack.c.0.s8 %v1831
    %v1833 = vlaneseq
    %v1834 = vshrl.u32 %v1833, 7
    %v1835 = vsub.s32 %v1832, %v1834
    %v1836 = vrot.slane %v1828, %v1835
    %v1838 = vunpack.c.l.s4 1966171168
    %v1839 = vunpack.c.0.s8 %v1838
    %v1840 = vlaneseq
    %v1841 = vshrl.u32 %v1840, 7
    %v1842 = vsub.s32 %v1839, %v1841
    %v1843 = vrot.slane %v1829, %v1842
    %v1846 = vadd.f32 %v1713, %v1836
    %v1847 = vadd.f32 %v1715, %v1843
    %v1848 = vmul.f32 %v1846, 0.5
    %v1849 = vmul.f32 %v1847, 0.5
    %v1850 = vtanh.pop %v1848
    %v1851 = vtanh.pop %v1849
    %v1852 = vmul.f32 %v1850, 0.5
    %v1853 = vmul.f32 %v1851, 0.5
    %v1854 = vadd.f32 %v1852, 0.5
    %v1855 = vadd.f32 %v1853, 0.5
    %v1858 = vrot.slane %v1846, 1
    %v1859 = vrot.slane %v1847, 1
    %v1862 = vmul.f32 %v1858, 0.5
    %v1863 = vmul.f32 %v1859, 0.5
    %v1864 = vtanh.pop %v1862
    %v1865 = vtanh.pop %v1863
    %v1866 = vmul.f32 %v1864, 0.5
    %v1867 = vmul.f32 %v1865, 0.5
    %v1868 = vadd.f32 %v1866, 0.5
    %v1869 = vadd.f32 %v1867, 0.5
    %v1870 = vrot.slane %v1846, 2
    %v1871 = vrot.slane %v1847, 2
    %v1874 = vtanh.pop %v1870
    %v1875 = vtanh.pop %v1871
    %v1876 = vrot.slane %v1846, 3
    %v1877 = vrot.slane %v1847, 3
    %v1880 = vmul.f32 %v1876, 0.5
    %v1881 = vmul.f32 %v1877, 0.5
    %v1882 = vtanh.pop %v1880
    %v1883 = vtanh.pop %v1881
    %v1884 = vmul.f32 %v1882, 0.5
    %v1885 = vmul.f32 %v1883, 0.5
    %v1886 = vadd.f32 %v1884, 0.5
    %v1887 = vadd.f32 %v1885, 0.5
    %v1888 = vmul.f32 %v1868, %v1704
    %v1889 = vmul.f32 %v1869, %v1705
    %v1890 = vmul.f32 %v1854, %v1874
    %v1891 = vmul.f32 %v1855, %v1875
    %v1892 = vadd.f32 %v1888, %v1890
    %v1893 = vadd.f32 %v1889, %v1891
    %v1894 = vtanh.pop %v1892
    %v1895 = vtanh.pop %v1893
    %v1896 = vmul.f32 %v1886, %v1894
    %v1897 = vmul.f32 %v1887, %v1895
    %1898 = vst [vmem:[#allocation3 + $0x7] sm:$0x1] %v1896
    %1899 = vst [vmem:[#allocation3 + $0xf] sm:$0x1] %v1897
    %v1902 = vcombine.low %v1896, %v1897
    %v1904 = vunpack.c.l.s4 1966171168
    %v1905 = vunpack.c.0.s8 %v1904
    %v1906 = vlaneseq
    %v1907 = vshrl.u32 %v1906, 7
    %v1908 = vsub.s32 %v1905, %v1907
    %v1909 = vrot.slane %v1902, %v1908
    %v1911 = vunpack.c.l.s4 1966171168
    %v1912 = vunpack.c.0.s8 %v1911
    %v1913 = vlaneseq
    %v1914 = vshrl.u32 %v1913, 7
    %v1915 = vsub.s32 %v1912, %v1914
    %v1916 = vrot.slane %v1909, %v1915
    %1918 = vst [vmem:[#allocation6] sm:$0x3] %v1916
    %v1921 = vcombine.low %v1892, %v1893
    %v1923 = vunpack.c.l.s4 1966171168
    %v1924 = vunpack.c.0.s8 %v1923
    %v1925 = vlaneseq
    %v1926 = vshrl.u32 %v1925, 7
    %v1927 = vsub.s32 %v1924, %v1926
    %v1928 = vrot.slane %v1921, %v1927
    %v1930 = vunpack.c.l.s4 1966171168
    %v1931 = vunpack.c.0.s8 %v1930
    %v1932 = vlaneseq
    %v1933 = vshrl.u32 %v1932, 7
    %v1934 = vsub.s32 %v1931, %v1933
    %v1935 = vrot.slane %v1928, %v1934
    %1937 = vst [vmem:[#allocation8] sm:$0x3] %v1935
    %v1938 = vld [vmem:[#allocation3] sm:$0xff]
    %v1939 = vld [vmem:[#allocation3 + $0x8] sm:$0xff]
    %v1940 = vpack.c.bf16 %v1938, %v1938
    %v1941 = vpack.c.bf16 %v1939, %v1939
    %v1942 = vld [vmem:[%s4] sm:$0xf]
    %v1943 = vld [vmem:[%s4 + $0x4] sm:$0xf]
    %v1944 = vld [vmem:[%s4 + $0x8] sm:$0xf]
    %v1945 = vld [vmem:[%s4 + $0xc] sm:$0xf]
    %v1946 = vld [vmem:[%s4 + $0x10] sm:$0xf]
    %v1947 = vld [vmem:[%s4 + $0x14] sm:$0xf]
    %v1948 = vld [vmem:[%s4 + $0x18] sm:$0xf]
    %v1949 = vld [vmem:[%s4 + $0x1c] sm:$0xf]
    %v1950 = vld [vmem:[%s4 + $0x20] sm:$0xf]
    %v1951 = vld [vmem:[%s4 + $0x24] sm:$0xf]
    %v1952 = vld [vmem:[%s4 + $0x28] sm:$0xf]
    %v1953 = vld [vmem:[%s4 + $0x2c] sm:$0xf]
    %v1954 = vld [vmem:[%s4 + $0x30] sm:$0xf]
    %v1955 = vld [vmem:[%s4 + $0x34] sm:$0xf]
    %v1956 = vld [vmem:[%s4 + $0x38] sm:$0xf]
    %v1957 = vld [vmem:[%s4 + $0x3c] sm:$0xf]
    %v1958 = vld [vmem:[%s5] sm:$0x1]
    %v1960 = vlaneseq
    %v1961 = vshrl.u32 %v1960, 7
    %v1962 = vsub.s32 0, %v1961
    %v1963 = vrot.slane %v1958, %v1962
    %v1967 = vunpack.c.l.b16 %v1940
    %v1968 = vunpack.c.l.b16 %v1941
    %v1969 = vpack.c.b16 %v1968, %v1967
    %v1987 = vunpack.c.l.b16 %v1942
    %v1988 = vunpack.c.l.b16 %v1943
    %v1989 = vunpack.c.l.b16 %v1944
    %v1990 = vunpack.c.l.b16 %v1945
    %v1991 = vunpack.c.l.b16 %v1946
    %v1992 = vunpack.c.l.b16 %v1947
    %v1993 = vunpack.c.l.b16 %v1948
    %v1994 = vunpack.c.l.b16 %v1949
    %v1995 = vunpack.c.l.b16 %v1950
    %v1996 = vunpack.c.l.b16 %v1951
    %v1997 = vunpack.c.l.b16 %v1952
    %v1998 = vunpack.c.l.b16 %v1953
    %v1999 = vunpack.c.l.b16 %v1954
    %v2000 = vunpack.c.l.b16 %v1955
    %v2001 = vunpack.c.l.b16 %v1956
    %v2002 = vunpack.c.l.b16 %v1957
    %v2003 = vpack.c.b16 %v1988, %v1987
    %v2004 = vpack.c.b16 %v1990, %v1989
    %v2005 = vpack.c.b16 %v1992, %v1991
    %v2006 = vpack.c.b16 %v1994, %v1993
    %v2007 = vpack.c.b16 %v1996, %v1995
    %v2008 = vpack.c.b16 %v1998, %v1997
    %v2009 = vpack.c.b16 %v2000, %v1999
    %v2010 = vpack.c.b16 %v2002, %v2001
    %2019 = vmatprep.subr.bf16.mxu0 0
    %2020 = vmatpush1.bf16.msra.mxu0 %v2003
    %2021 = vmatprep.subr.bf16.mxu0 0
    %2022 = vmatpush1.bf16.msra.mxu0 %v2004
    %2023 = vmatprep.subr.bf16.mxu0 0
    %2024 = vmatpush1.bf16.msra.mxu0 %v2005
    %2025 = vmatprep.subr.bf16.mxu0 0
    %2026 = vmatpush1.bf16.msra.mxu0 %v2006
    %2027 = vmatprep.subr.bf16.mxu0 0
    %2028 = vmatpush1.bf16.msra.mxu0 %v2007
    %2029 = vmatprep.subr.bf16.mxu0 0
    %2030 = vmatpush1.bf16.msra.mxu0 %v2008
    %2031 = vmatprep.subr.bf16.mxu0 0
    %2032 = vmatpush1.bf16.msra.mxu0 %v2009
    %2033 = vmatprep.subr.bf16.mxu0 0
    %2034 = vmatpush1.bf16.msra.mxu0 %v2010
    %2035 = vmatprep.subr.bf16.mxu0 0
    %2036 = vmatpush1.bf16.msra.mxu0 0
    %2037 = vmatprep.subr.bf16.mxu0 0
    %2038 = vmatpush1.bf16.msra.mxu0 0
    %2039 = vmatprep.subr.bf16.mxu0 0
    %2040 = vmatpush1.bf16.msra.mxu0 0
    %2041 = vmatprep.subr.bf16.mxu0 0
    %2042 = vmatpush1.bf16.msra.mxu0 0
    %2043 = vmatprep.subr.bf16.mxu0 0
    %2044 = vmatpush1.bf16.msra.mxu0 0
    %2045 = vmatprep.subr.bf16.mxu0 0
    %2046 = vmatpush1.bf16.msra.mxu0 0
    %2047 = vmatprep.subr.bf16.mxu0 0
    %2048 = vmatpush1.bf16.msra.mxu0 0
    %2049 = vmatprep.subr.bf16.mxu0 0
    %2050 = vmatpush1.bf16.msra.mxu0 0
    %2051 = vmatprep.mubr.bf16.mxu0 0
    %2052 = vmatmul.mubr.bf16.gmra.mrb[0].mxu0 %v1969
    %v2053 = vpop.f32.mrb[0].mxu0
    %v2054 = vadd.f32 %v1963, %v2053
    %v2055 = vpop.f32.mrb[0].mxu0
    %v2056 = vpop.f32.mrb[0].mxu0
    %v2057 = vadd.f32 %v1963, %v2056
    %v2058 = vpop.f32.mrb[0].mxu0
    %2059 = vdwg.mxu0
    %2060 = vst [vmem:[#allocation4] sm:$0xff] %v2054
    %2061 = vst [vmem:[#allocation4 + $0x8] sm:$0xff] %v2057
    // Predicated region
    $region30: #{lstm_lm_forward.1} parent=1 // pred_check
      _
    $region31: #{lstm_lm_forward.1} parent=1 // pred_check_branch
      %2063 = sbr.rel (0) target = $region33
    $region32: #{lstm_lm_forward.1} parent=1 // pred_region
      %s2065 = ssub.s32 256, 256
      %2066 = vsyncadd [#allocation5], %s2065
      %s2067 = sshll.u32 [#allocation4], 4
      %s2068 = int_to_ptr.vmem [resolvable:$true] %s2067
      %2073 = dma.vmem_to_hbm [thread:$0]  %s2068, 256, %s6, [#allocation5], 128, 128, 8
    $region33: #{lstm_lm_forward.1} parent=1 // pred_fallthru
      _
    // Predicated region
    $region34: #{lstm_lm_forward.1} parent=1 // pred_check
      _
    $region35: #{lstm_lm_forward.1} parent=1 // pred_check_branch
      %2075 = sbr.rel (0) target = $region37
    $region36: #{lstm_lm_forward.1} parent=1 // pred_region
      %s2077 = ssub.s32 32, 32
      %2078 = vsyncadd [#allocation7], %s2077
      %s2080 = sshll.u32 [#allocation6], 4
      %s2081 = int_to_ptr.vmem [resolvable:$true] %s2080
      %2083 = dma.vmem_to_hbm [thread:$0]  %s2081, 32, %s7, [#allocation7]
    $region37: #{lstm_lm_forward.1} parent=1 // pred_fallthru
      _
    // Predicated region
    $region38: #{lstm_lm_forward.1} parent=1 // pred_check
      _
    $region39: #{lstm_lm_forward.1} parent=1 // pred_check_branch
      %2085 = sbr.rel (0) target = $region41
    $region40: #{lstm_lm_forward.1} parent=1 // pred_region
      %s2087 = ssub.s32 32, 32
      %2088 = vsyncadd [#allocation7], %s2087
      %s2090 = sshll.u32 [#allocation8], 4
      %s2091 = int_to_ptr.vmem [resolvable:$true] %s2090
      %2093 = dma.vmem_to_hbm [thread:$0]  %s2091, 32, %s8, [#allocation7]
    $region41: #{lstm_lm_forward.1} parent=1 // pred_fallthru
      _
    // Predicated region
    $region42: #{lstm_lm_forward.1} parent=1 // pred_check
      _
    $region43: #{lstm_lm_forward.1} parent=1 // pred_check_branch
      %2095 = sbr.rel (0) target = $region45
    $region44: #{lstm_lm_forward.1} parent=1 // pred_region
      %2096 = dma.done [#allocation5], 256
    $region45: #{lstm_lm_forward.1} parent=1 // pred_fallthru
      _
    // Predicated region
    $region46: #{lstm_lm_forward.1} parent=1 // pred_check
      _
    $region47: #{lstm_lm_forward.1} parent=1 // pred_check_branch
      %2098 = sbr.rel (0) target = $region49
    $region48: #{lstm_lm_forward.1} parent=1 // pred_region
      %2099 = dma.done [#allocation7], 32
    $region49: #{lstm_lm_forward.1} parent=1 // pred_fallthru
      _
    // Predicated region
    $region50: #{lstm_lm_forward.1} parent=1 // pred_check
      _
    $region51: #{lstm_lm_forward.1} parent=1 // pred_check_branch
      %2101 = sbr.rel (0) target = $region53
    $region52: #{lstm_lm_forward.1} parent=1 // pred_region
      %2102 = dma.done [#allocation7], 32
    $region53: #{lstm_lm_forward.1} parent=1 // pred_fallthru
      _
    %2103 = vsyncpa [#allocation5], 1
    %2104 = vsyncpa [#allocation7], 1

</llo_original>
